<compile_context>
chip_gen: v5e
topology: v5e:2x2
jax: 0.10.0
libtpu: 0.0.40
codegen_flags: <defaults>
</compile_context>

<pallas_src>
import functools

import jax
import jax.numpy as jnp
from jax.experimental import pallas as pl
from jax.experimental.pallas import tpu as pltpu


def _lstm_kernel(xw_ref,      # (t_tile, B, 4H) f32 : hoisted x@Wih_l0^T + b0
                 w0_ref,      # (H, 8H)  f32 : [W_hh_l0^T | W_ih_l1^T]
                 w1_ref,      # (H, 4H)  f32 : W_hh_l1^T
                 b1_ref,      # (1, 4H)  f32 : b_ih_l1 + b_hh_l1
                 out_ref,     # (B, H)   f32 : final hidden state of layer 1
                 h0_ref, c0_ref, h1_ref, c1_ref,   # VMEM scratch, (B, H) f32
                 *, hidden, t_tile, seq_len, n_tiles):
    H = hidden
    B = h0_ref.shape[0]
    tile = pl.program_id(0)
    last_tile = n_tiles - 1
    rem = seq_len % t_tile            # static Python int (0 -> no padded tail)

    @pl.when(tile == 0)
    def _init():
        h0_ref[...] = jnp.zeros_like(h0_ref)
        c0_ref[...] = jnp.zeros_like(c0_ref)
        h1_ref[...] = jnp.zeros_like(h1_ref)
        c1_ref[...] = jnp.zeros_like(c1_ref)

    w0 = w0_ref[...]                                   # (H, 8H)
    w1 = w1_ref[...]                                   # (H, 4H)
    b1b = jnp.broadcast_to(b1_ref[...], (B, 4 * H))    # hoisted broadcast

    h0 = h0_ref[...]   # h0_{s-1}
    c0 = c0_ref[...]   # c0_{s-1}
    h1 = h1_ref[...]   # h1_{s-2}
    c1 = c1_ref[...]   # c1_{s-2}

    # Static unroll over the time tile: t is a Python int, so validity checks
    # below are resolved at trace time wherever possible.
    for t in range(t_tile):
        # ONE serial MXU stage per combined step: both dots use only the
        # previous-step carries, so they issue together.
        g_both = jnp.dot(h0, w0, preferred_element_type=jnp.float32)   # (B, 8H)
        g1_rec = jnp.dot(h1, w1, preferred_element_type=jnp.float32)   # (B, 4H)

        gates0 = xw_ref[t] + g_both[:, :4 * H]            # layer 0, time s
        gates1 = g_both[:, 4 * H:] + g1_rec + b1b         # layer 1, time s-1

        # --- layer 0 update (time s): whole-tile sigmoid, tanh on g slice.
        sg0 = jax.nn.sigmoid(gates0)
        gg0 = jnp.tanh(gates0[:, 2 * H:3 * H])
        c0n = sg0[:, H:2 * H] * c0 + sg0[:, :H] * gg0
        h0n = sg0[:, 3 * H:] * jnp.tanh(c0n)

        # --- layer 1 update (time s-1).
        sg1 = jax.nn.sigmoid(gates1)
        gg1 = jnp.tanh(gates1[:, 2 * H:3 * H])
        c1n = sg1[:, H:2 * H] * c1 + sg1[:, :H] * gg1
        h1n = sg1[:, 3 * H:] * jnp.tanh(c1n)

        # Layer-0 validity: global step s = tile*t_tile + t < seq_len.  Only the
        # padded tail of the LAST tile can be invalid (static check on t).
        if rem != 0 and t >= rem:
            v0 = tile < last_tile
            h0 = jnp.where(v0, h0n, h0)
            c0 = jnp.where(v0, c0n, c0)
        else:
            h0, c0 = h0n, c0n

        # Layer-1 validity in-loop: 1 <= s <= seq_len - 1 (time T-1 handled by
        # the epilogue).  Invalid only at the very first global step and on the
        # padded tail.
        if rem != 0 and t >= rem:
            v1 = tile < last_tile
        elif t == 0:
            v1 = tile > 0
        else:
            v1 = None
        if v1 is None:
            h1, c1 = h1n, c1n
        else:
            h1 = jnp.where(v1, h1n, h1)
            c1 = jnp.where(v1, c1n, c1)

    # Persist carries for the next time tile.
    h0_ref[...] = h0
    c0_ref[...] = c0
    h1_ref[...] = h1
    c1_ref[...] = c1

    @pl.when(tile == last_tile)
    def _finalize():
        # Epilogue: layer-1 update for time T-1 using h0_{T-1}, h1_{T-2}, c1_{T-2}.
        gates1 = (jnp.dot(h0, w0[:, 4 * H:], preferred_element_type=jnp.float32)
                  + jnp.dot(h1, w1, preferred_element_type=jnp.float32) + b1b)
        sg1 = jax.nn.sigmoid(gates1)
        gg1 = jnp.tanh(gates1[:, 2 * H:3 * H])
        c1n = sg1[:, H:2 * H] * c1 + sg1[:, :H] * gg1
        out_ref[...] = sg1[:, 3 * H:] * jnp.tanh(c1n)


def pp_model_forward(x, params, n_hidden, t_tile=None):
    """x: (B, T, F) float32 (PyTorch batch_first layout). Returns (B, 1)."""
    B, T, F = x.shape
    H = n_hidden
    if t_tile is None:
        t_tile = min(T, 64)
    n_tiles = pl.cdiv(T, t_tile)
    T_pad = n_tiles * t_tile

    wih0_t = params["w_ih_l0"].T                                     # (F, 4H)
    b0 = params["b_ih_l0"] + params["b_hh_l0"]                       # (4H,)
    # Fused recurrent weights: h0 feeds both layer-0 recurrence and the layer-1
    # input projection in a single dot; layer-1 recurrence stays separate so no
    # per-step concatenate is needed.
    w0 = jnp.concatenate([params["w_hh_l0"].T, params["w_ih_l1"].T],
                         axis=1)                                     # (H, 8H)
    w1 = params["w_hh_l1"].T                                         # (H, 4H)
    b1 = (params["b_ih_l1"] + params["b_hh_l1"]).reshape(1, 4 * H)   # (1, 4H)

    # Hoisted, time-independent layer-0 input projection: one f32 matmul.
    xw = jnp.einsum("btf,fg->tbg", x, wih0_t,
                    preferred_element_type=jnp.float32) + b0         # (T, B, 4H)
    if T_pad != T:
        xw = jnp.pad(xw, ((0, T_pad - T), (0, 0), (0, 0)))           # no OOB reads

    kernel = functools.partial(_lstm_kernel, hidden=H, t_tile=t_tile,
                               seq_len=T, n_tiles=n_tiles)
    const = lambda shape: pl.BlockSpec(shape, lambda i: (0, 0))

    h_last = pl.pallas_call(
        kernel,
        out_shape=jax.ShapeDtypeStruct((B, H), jnp.float32),
        grid_spec=pltpu.PrefetchScalarGridSpec(
            num_scalar_prefetch=0,
            grid=(n_tiles,),
            in_specs=[
                pl.BlockSpec((t_tile, B, 4 * H), lambda i: (i, 0, 0)),  # xw tile
                const((H, 8 * H)),    # fused recurrent weights (constant index)
                const((H, 4 * H)),    # layer-1 recurrent weights
                const((1, 4 * H)),    # layer-1 bias
            ],
            out_specs=pl.BlockSpec((B, H), lambda i: (0, 0)),
            scratch_shapes=[pltpu.VMEM((B, H), jnp.float32)] * 4,  # h0,c0,h1,c1
        ),
        compiler_params=pltpu.CompilerParams(
            dimension_semantics=("arbitrary",)),      # time recurrence is serial
    )(xw, w0, w1, b1)

    # Tiny (H, 1) regressor + bias in the wrapper (lane-dense kernel output).
    return h_last @ params["w_reg"].T + params["b_reg"]


def _init_params(key, n_features, n_hidden):
    """Deterministic init matching PyTorch LSTM/Linear parameter shapes."""
    H, F = n_hidden, n_features
    k = 1.0 / jnp.sqrt(jnp.float32(H))
    names_shapes = [
        ("w_ih_l0", (4 * H, F)), ("w_hh_l0", (4 * H, H)),
        ("b_ih_l0", (4 * H,)),   ("b_hh_l0", (4 * H,)),
        ("w_ih_l1", (4 * H, H)), ("w_hh_l1", (4 * H, H)),
        ("b_ih_l1", (4 * H,)),   ("b_hh_l1", (4 * H,)),
        ("w_reg", (1, H)),       ("b_reg", (1,)),
    ]
    keys = jax.random.split(key, len(names_shapes))
    return {
        name: jax.random.uniform(kk, shape, jnp.float32, -k, k)
        for kk, (name, shape) in zip(keys, names_shapes)
    }


def _reference_forward(x, params, n_hidden):
    """Pure-JAX f32 reference (lax.scan) matching PyTorch eval semantics."""
    H = n_hidden

    def cell(x_in, h, c, w_ih, w_hh, b_ih, b_hh):
        gates = x_in @ w_ih.T + h @ w_hh.T + b_ih + b_hh
        i_g = jax.nn.sigmoid(gates[:, 0 * H:1 * H])
        f_g = jax.nn.sigmoid(gates[:, 1 * H:2 * H])
        g_g = jnp.tanh(gates[:, 2 * H:3 * H])
        o_g = jax.nn.sigmoid(gates[:, 3 * H:4 * H])
        c_new = f_g * c + i_g * g_g
        h_new = o_g * jnp.tanh(c_new)
        return h_new, c_new

    B = x.shape[0]
    zeros = jnp.zeros((B, H), jnp.float32)

    def step(carry, x_t):
        h0, c0, h1, c1 = carry
        h0, c0 = cell(x_t, h0, c0, params["w_ih_l0"], params["w_hh_l0"],
                      params["b_ih_l0"], params["b_hh_l0"])
        h1, c1 = cell(h0, h1, c1, params["w_ih_l1"], params["w_hh_l1"],
                      params["b_ih_l1"], params["b_hh_l1"])
        return (h0, c0, h1, c1), None

    (h0, c0, h1, c1), _ = jax.lax.scan(step, (zeros, zeros, zeros, zeros),
                                       jnp.transpose(x, (1, 0, 2)))
    return h1 @ params["w_reg"].T + params["b_reg"]


if __name__ == "__main__":
    B, T, F, H = 4, 8, 8, 32  # batch, seq len, n_features, n_hidden

    key = jax.random.PRNGKey(0)
    k_x, k_p = jax.random.split(key)
    x = jax.random.normal(k_x, (B, T, F), jnp.float32)
    params = _init_params(k_p, F, H)

    out = pp_model_forward(x, params, H)
    out = jax.block_until_ready(out)

    ref = _reference_forward(x, params, H)
    assert out.shape == (B, 1)
    # All-f32 matmuls now; tolerance covers TPU default matmul precision.
    assert jnp.allclose(out, ref, atol=1e-2, rtol=1e-2), (out, ref)

    print("KERNEL_OK")
</pallas_src>

<mosaic_0001>
module attributes {stable_mosaic.version = 11 : i64} {
  func.func @_lstm_kernel(%arg0: i32, %arg1: memref<8x4x128xf32, #tpu.memory_space<vmem>>, %arg2: memref<32x256xf32, #tpu.memory_space<vmem>>, %arg3: memref<32x128xf32, #tpu.memory_space<vmem>>, %arg4: memref<1x128xf32, #tpu.memory_space<vmem>>, %arg5: memref<4x32xf32, #tpu.memory_space<vmem>>, %arg6: memref<4x32xf32, #tpu.memory_space<vmem>>, %arg7: memref<4x32xf32, #tpu.memory_space<vmem>>, %arg8: memref<4x32xf32, #tpu.memory_space<vmem>>, %arg9: memref<4x32xf32, #tpu.memory_space<vmem>>) attributes {dimension_semantics = [#tpu.dimension_semantics<arbitrary>], iteration_bounds = array<i64: 1>, scalar_prefetch = 0 : i64, scratch_operands = 4 : i64, tpu.core_type = #tpu.core_type<tc>, window_params = [{transform_indices = @transform_0, window_bounds = array<i64: 8, 4, 128>}, {pipeline_mode = #tpu.pipeline_mode<synchronous>, transform_indices = @transform_1, window_bounds = array<i64: 32, 256>}, {pipeline_mode = #tpu.pipeline_mode<synchronous>, transform_indices = @transform_2, window_bounds = array<i64: 32, 128>}, {pipeline_mode = #tpu.pipeline_mode<synchronous>, transform_indices = @transform_3, window_bounds = array<i64: 1, 128>}, {pipeline_mode = #tpu.pipeline_mode<synchronous>, transform_indices = @transform_4, window_bounds = array<i64: 4, 32>}]} {
    %c0_i32 = arith.constant 0 : i32
    %0 = arith.cmpi eq, %arg0, %c0_i32 : i32
    %1 = arith.extui %0 : i1 to i32
    %c0_i32_0 = arith.constant 0 : i32
    %2 = arith.cmpi ne, %1, %c0_i32_0 : i32
    scf.if %2 {
      %cst_73 = arith.constant 0.000000e+00 : f32
      %334 = vector.broadcast %cst_73 : f32 to vector<4x32xf32>
      %c0_74 = arith.constant 0 : index
      %c0_75 = arith.constant 0 : index
      %335 = vector.load %arg6[%c0_74, %c0_75] : memref<4x32xf32, #tpu.memory_space<vmem>>, vector<4x32xf32>
      tpu.vector_store %arg6[%c0_74, %c0_75], %334 {strides = array<i32>} : memref<4x32xf32, #tpu.memory_space<vmem>>, vector<4x32xf32>,
      %cst_76 = arith.constant 0.000000e+00 : f32
      %336 = vector.broadcast %cst_76 : f32 to vector<4x32xf32>
      %c0_77 = arith.constant 0 : index
      %c0_78 = arith.constant 0 : index
      %337 = vector.load %arg7[%c0_77, %c0_78] : memref<4x32xf32, #tpu.memory_space<vmem>>, vector<4x32xf32>
      tpu.vector_store %arg7[%c0_77, %c0_78], %336 {strides = array<i32>} : memref<4x32xf32, #tpu.memory_space<vmem>>, vector<4x32xf32>,
      %cst_79 = arith.constant 0.000000e+00 : f32
      %338 = vector.broadcast %cst_79 : f32 to vector<4x32xf32>
      %c0_80 = arith.constant 0 : index
      %c0_81 = arith.constant 0 : index
      %339 = vector.load %arg8[%c0_80, %c0_81] : memref<4x32xf32, #tpu.memory_space<vmem>>, vector<4x32xf32>
      tpu.vector_store %arg8[%c0_80, %c0_81], %338 {strides = array<i32>} : memref<4x32xf32, #tpu.memory_space<vmem>>, vector<4x32xf32>,
      %cst_82 = arith.constant 0.000000e+00 : f32
      %340 = vector.broadcast %cst_82 : f32 to vector<4x32xf32>
      %c0_83 = arith.constant 0 : index
      %c0_84 = arith.constant 0 : index
      %341 = vector.load %arg9[%c0_83, %c0_84] : memref<4x32xf32, #tpu.memory_space<vmem>>, vector<4x32xf32>
      tpu.vector_store %arg9[%c0_83, %c0_84], %340 {strides = array<i32>} : memref<4x32xf32, #tpu.memory_space<vmem>>, vector<4x32xf32>,
    } else {
    }
    %c0 = arith.constant 0 : index
    %c0_1 = arith.constant 0 : index
    %3 = vector.load %arg2[%c0, %c0_1] : memref<32x256xf32, #tpu.memory_space<vmem>>, vector<32x256xf32>
    %c0_2 = arith.constant 0 : index
    %c0_3 = arith.constant 0 : index
    %4 = vector.load %arg3[%c0_2, %c0_3] : memref<32x128xf32, #tpu.memory_space<vmem>>, vector<32x128xf32>
    %c0_4 = arith.constant 0 : index
    %c0_5 = arith.constant 0 : index
    %5 = vector.load %arg4[%c0_4, %c0_5] : memref<1x128xf32, #tpu.memory_space<vmem>>, vector<1x128xf32>
    %6 = vector.shape_cast %5 : vector<1x128xf32> to vector<1x128xf32>
    %7 = vector.broadcast %6 : vector<1x128xf32> to vector<4x128xf32>
    %c0_6 = arith.constant 0 : index
    %c0_7 = arith.constant 0 : index
    %8 = vector.load %arg6[%c0_6, %c0_7] : memref<4x32xf32, #tpu.memory_space<vmem>>, vector<4x32xf32>
    %c0_8 = arith.constant 0 : index
    %c0_9 = arith.constant 0 : index
    %9 = vector.load %arg7[%c0_8, %c0_9] : memref<4x32xf32, #tpu.memory_space<vmem>>, vector<4x32xf32>
    %c0_10 = arith.constant 0 : index
    %c0_11 = arith.constant 0 : index
    %10 = vector.load %arg8[%c0_10, %c0_11] : memref<4x32xf32, #tpu.memory_space<vmem>>, vector<4x32xf32>
    %c0_12 = arith.constant 0 : index
    %c0_13 = arith.constant 0 : index
    %11 = vector.load %arg9[%c0_12, %c0_13] : memref<4x32xf32, #tpu.memory_space<vmem>>, vector<4x32xf32>
    %cst = arith.constant dense<0.000000e+00> : vector<4x256xf32>
    %12 = tpu.matmul %8, %3, %cst {dimension_numbers = #tpu.dot_dimension_numbers<[1], [0], [0], [1], [0, 0, 1, 1], [], []>} : vector<4x32xf32>, vector<32x256xf32>, vector<4x256xf32> -> vector<4x256xf32>
    %cst_14 = arith.constant dense<0.000000e+00> : vector<4x128xf32>
    %13 = tpu.matmul %10, %4, %cst_14 {dimension_numbers = #tpu.dot_dimension_numbers<[1], [0], [0], [1], [0, 0, 1, 1], [], []>} : vector<4x32xf32>, vector<32x128xf32>, vector<4x128xf32> -> vector<4x128xf32>
    %c0_15 = arith.constant 0 : index
    %c0_16 = arith.constant 0 : index
    %c0_17 = arith.constant 0 : index
    %14 = vector.load %arg1[%c0_15, %c0_16, %c0_17] : memref<8x4x128xf32, #tpu.memory_space<vmem>>, vector<1x4x128xf32>
    %15 = vector.shape_cast %14 : vector<1x4x128xf32> to vector<4x128xf32>
    %16 = vector.extract_strided_slice %12 {offsets = [0, 0], sizes = [4, 128], strides = [1, 1]} : vector<4x256xf32> to vector<4x128xf32>
    %17 = arith.addf %15, %16 : vector<4x128xf32>
    %18 = vector.extract_strided_slice %12 {offsets = [0, 128], sizes = [4, 128], strides = [1, 1]} : vector<4x256xf32> to vector<4x128xf32>
    %19 = arith.addf %18, %13 : vector<4x128xf32>
    %20 = arith.addf %19, %7 : vector<4x128xf32>
    %21 = arith.negf %17 : vector<4x128xf32>
    %22 = math.exp %21 : vector<4x128xf32>
    %cst_18 = arith.constant 1.000000e+00 : f32
    %23 = vector.broadcast %cst_18 : f32 to vector<4x128xf32>
    %24 = arith.addf %23, %22 : vector<4x128xf32>
    %25 = arith.divf %23, %24 : vector<4x128xf32>
    %26 = vector.extract_strided_slice %17 {offsets = [0, 64], sizes = [4, 32], strides = [1, 1]} : vector<4x128xf32> to vector<4x32xf32>
    %27 = math.tanh %26 : vector<4x32xf32>
    %28 = vector.extract_strided_slice %25 {offsets = [0, 32], sizes = [4, 32], strides = [1, 1]} : vector<4x128xf32> to vector<4x32xf32>
    %29 = arith.mulf %28, %9 : vector<4x32xf32>
    %30 = vector.extract_strided_slice %25 {offsets = [0, 0], sizes = [4, 32], strides = [1, 1]} : vector<4x128xf32> to vector<4x32xf32>
    %31 = arith.mulf %30, %27 : vector<4x32xf32>
    %32 = arith.addf %29, %31 : vector<4x32xf32>
    %33 = vector.extract_strided_slice %25 {offsets = [0, 96], sizes = [4, 32], strides = [1, 1]} : vector<4x128xf32> to vector<4x32xf32>
    %34 = math.tanh %32 : vector<4x32xf32>
    %35 = arith.mulf %33, %34 : vector<4x32xf32>
    %36 = arith.negf %20 : vector<4x128xf32>
    %37 = math.exp %36 : vector<4x128xf32>
    %cst_19 = arith.constant 1.000000e+00 : f32
    %38 = vector.broadcast %cst_19 : f32 to vector<4x128xf32>
    %39 = arith.addf %38, %37 : vector<4x128xf32>
    %40 = arith.divf %38, %39 : vector<4x128xf32>
    %41 = vector.extract_strided_slice %20 {offsets = [0, 64], sizes = [4, 32], strides = [1, 1]} : vector<4x128xf32> to vector<4x32xf32>
    %42 = math.tanh %41 : vector<4x32xf32>
    %43 = vector.extract_strided_slice %40 {offsets = [0, 32], sizes = [4, 32], strides = [1, 1]} : vector<4x128xf32> to vector<4x32xf32>
    %44 = arith.mulf %43, %11 : vector<4x32xf32>
    %45 = vector.extract_strided_slice %40 {offsets = [0, 0], sizes = [4, 32], strides = [1, 1]} : vector<4x128xf32> to vector<4x32xf32>
    %46 = arith.mulf %45, %42 : vector<4x32xf32>
    %47 = arith.addf %44, %46 : vector<4x32xf32>
    %48 = vector.extract_strided_slice %40 {offsets = [0, 96], sizes = [4, 32], strides = [1, 1]} : vector<4x128xf32> to vector<4x32xf32>
    %49 = math.tanh %47 : vector<4x32xf32>
    %50 = arith.mulf %48, %49 : vector<4x32xf32>
    %c0_i32_20 = arith.constant 0 : i32
    %51 = arith.cmpi sgt, %arg0, %c0_i32_20 : i32
    %52 = arith.select %51, %50, %10 : vector<4x32xf32>
    %53 = arith.select %51, %47, %11 : vector<4x32xf32>
    %cst_21 = arith.constant dense<0.000000e+00> : vector<4x256xf32>
    %54 = tpu.matmul %35, %3, %cst_21 {dimension_numbers = #tpu.dot_dimension_numbers<[1], [0], [0], [1], [0, 0, 1, 1], [], []>} : vector<4x32xf32>, vector<32x256xf32>, vector<4x256xf32> -> vector<4x256xf32>
    %cst_22 = arith.constant dense<0.000000e+00> : vector<4x128xf32>
    %55 = tpu.matmul %52, %4, %cst_22 {dimension_numbers = #tpu.dot_dimension_numbers<[1], [0], [0], [1], [0, 0, 1, 1], [], []>} : vector<4x32xf32>, vector<32x128xf32>, vector<4x128xf32> -> vector<4x128xf32>
    %c1 = arith.constant 1 : index
    %c0_23 = arith.constant 0 : index
    %c0_24 = arith.constant 0 : index
    %56 = vector.load %arg1[%c1, %c0_23, %c0_24] : memref<8x4x128xf32, #tpu.memory_space<vmem>>, vector<1x4x128xf32>
    %57 = vector.shape_cast %56 : vector<1x4x128xf32> to vector<4x128xf32>
    %58 = vector.extract_strided_slice %54 {offsets = [0, 0], sizes = [4, 128], strides = [1, 1]} : vector<4x256xf32> to vector<4x128xf32>
    %59 = arith.addf %57, %58 : vector<4x128xf32>
    %60 = vector.extract_strided_slice %54 {offsets = [0, 128], sizes = [4, 128], strides = [1, 1]} : vector<4x256xf32> to vector<4x128xf32>
    %61 = arith.addf %60, %55 : vector<4x128xf32>
    %62 = arith.addf %61, %7 : vector<4x128xf32>
    %63 = arith.negf %59 : vector<4x128xf32>
    %64 = math.exp %63 : vector<4x128xf32>
    %cst_25 = arith.constant 1.000000e+00 : f32
    %65 = vector.broadcast %cst_25 : f32 to vector<4x128xf32>
    %66 = arith.addf %65, %64 : vector<4x128xf32>
    %67 = arith.divf %65, %66 : vector<4x128xf32>
    %68 = vector.extract_strided_slice %59 {offsets = [0, 64], sizes = [4, 32], strides = [1, 1]} : vector<4x128xf32> to vector<4x32xf32>
    %69 = math.tanh %68 : vector<4x32xf32>
    %70 = vector.extract_strided_slice %67 {offsets = [0, 32], sizes = [4, 32], strides = [1, 1]} : vector<4x128xf32> to vector<4x32xf32>
    %71 = arith.mulf %70, %32 : vector<4x32xf32>
    %72 = vector.extract_strided_slice %67 {offsets = [0, 0], sizes = [4, 32], strides = [1, 1]} : vector<4x128xf32> to vector<4x32xf32>
    %73 = arith.mulf %72, %69 : vector<4x32xf32>
    %74 = arith.addf %71, %73 : vector<4x32xf32>
    %75 = vector.extract_strided_slice %67 {offsets = [0, 96], sizes = [4, 32], strides = [1, 1]} : vector<4x128xf32> to vector<4x32xf32>
    %76 = math.tanh %74 : vector<4x32xf32>
    %77 = arith.mulf %75, %76 : vector<4x32xf32>
    %78 = arith.negf %62 : vector<4x128xf32>
    %79 = math.exp %78 : vector<4x128xf32>
    %cst_26 = arith.constant 1.000000e+00 : f32
    %80 = vector.broadcast %cst_26 : f32 to vector<4x128xf32>
    %81 = arith.addf %80, %79 : vector<4x128xf32>
    %82 = arith.divf %80, %81 : vector<4x128xf32>
    %83 = vector.extract_strided_slice %62 {offsets = [0, 64], sizes = [4, 32], strides = [1, 1]} : vector<4x128xf32> to vector<4x32xf32>
    %84 = math.tanh %83 : vector<4x32xf32>
    %85 = vector.extract_strided_slice %82 {offsets = [0, 32], sizes = [4, 32], strides = [1, 1]} : vector<4x128xf32> to vector<4x32xf32>
    %86 = arith.mulf %85, %53 : vector<4x32xf32>
    %87 = vector.extract_strided_slice %82 {offsets = [0, 0], sizes = [4, 32], strides = [1, 1]} : vector<4x128xf32> to vector<4x32xf32>
    %88 = arith.mulf %87, %84 : vector<4x32xf32>
    %89 = arith.addf %86, %88 : vector<4x32xf32>
    %90 = vector.extract_strided_slice %82 {offsets = [0, 96], sizes = [4, 32], strides = [1, 1]} : vector<4x128xf32> to vector<4x32xf32>
    %91 = math.tanh %89 : vector<4x32xf32>
    %92 = arith.mulf %90, %91 : vector<4x32xf32>
    %cst_27 = arith.constant dense<0.000000e+00> : vector<4x256xf32>
    %93 = tpu.matmul %77, %3, %cst_27 {dimension_numbers = #tpu.dot_dimension_numbers<[1], [0], [0], [1], [0, 0, 1, 1], [], []>} : vector<4x32xf32>, vector<32x256xf32>, vector<4x256xf32> -> vector<4x256xf32>
    %cst_28 = arith.constant dense<0.000000e+00> : vector<4x128xf32>
    %94 = tpu.matmul %92, %4, %cst_28 {dimension_numbers = #tpu.dot_dimension_numbers<[1], [0], [0], [1], [0, 0, 1, 1], [], []>} : vector<4x32xf32>, vector<32x128xf32>, vector<4x128xf32> -> vector<4x128xf32>
    %c2 = arith.constant 2 : index
    %c0_29 = arith.constant 0 : index
    %c0_30 = arith.constant 0 : index
    %95 = vector.load %arg1[%c2, %c0_29, %c0_30] : memref<8x4x128xf32, #tpu.memory_space<vmem>>, vector<1x4x128xf32>
    %96 = vector.shape_cast %95 : vector<1x4x128xf32> to vector<4x128xf32>
    %97 = vector.extract_strided_slice %93 {offsets = [0, 0], sizes = [4, 128], strides = [1, 1]} : vector<4x256xf32> to vector<4x128xf32>
    %98 = arith.addf %96, %97 : vector<4x128xf32>
    %99 = vector.extract_strided_slice %93 {offsets = [0, 128], sizes = [4, 128], strides = [1, 1]} : vector<4x256xf32> to vector<4x128xf32>
    %100 = arith.addf %99, %94 : vector<4x128xf32>
    %101 = arith.addf %100, %7 : vector<4x128xf32>
    %102 = arith.negf %98 : vector<4x128xf32>
    %103 = math.exp %102 : vector<4x128xf32>
    %cst_31 = arith.constant 1.000000e+00 : f32
    %104 = vector.broadcast %cst_31 : f32 to vector<4x128xf32>
    %105 = arith.addf %104, %103 : vector<4x128xf32>
    %106 = arith.divf %104, %105 : vector<4x128xf32>
    %107 = vector.extract_strided_slice %98 {offsets = [0, 64], sizes = [4, 32], strides = [1, 1]} : vector<4x128xf32> to vector<4x32xf32>
    %108 = math.tanh %107 : vector<4x32xf32>
    %109 = vector.extract_strided_slice %106 {offsets = [0, 32], sizes = [4, 32], strides = [1, 1]} : vector<4x128xf32> to vector<4x32xf32>
    %110 = arith.mulf %109, %74 : vector<4x32xf32>
    %111 = vector.extract_strided_slice %106 {offsets = [0, 0], sizes = [4, 32], strides = [1, 1]} : vector<4x128xf32> to vector<4x32xf32>
    %112 = arith.mulf %111, %108 : vector<4x32xf32>
    %113 = arith.addf %110, %112 : vector<4x32xf32>
    %114 = vector.extract_strided_slice %106 {offsets = [0, 96], sizes = [4, 32], strides = [1, 1]} : vector<4x128xf32> to vector<4x32xf32>
    %115 = math.tanh %113 : vector<4x32xf32>
    %116 = arith.mulf %114, %115 : vector<4x32xf32>
    %117 = arith.negf %101 : vector<4x128xf32>
    %118 = math.exp %117 : vector<4x128xf32>
    %cst_32 = arith.constant 1.000000e+00 : f32
    %119 = vector.broadcast %cst_32 : f32 to vector<4x128xf32>
    %120 = arith.addf %119, %118 : vector<4x128xf32>
    %121 = arith.divf %119, %120 : vector<4x128xf32>
    %122 = vector.extract_strided_slice %101 {offsets = [0, 64], sizes = [4, 32], strides = [1, 1]} : vector<4x128xf32> to vector<4x32xf32>
    %123 = math.tanh %122 : vector<4x32xf32>
    %124 = vector.extract_strided_slice %121 {offsets = [0, 32], sizes = [4, 32], strides = [1, 1]} : vector<4x128xf32> to vector<4x32xf32>
    %125 = arith.mulf %124, %89 : vector<4x32xf32>
    %126 = vector.extract_strided_slice %121 {offsets = [0, 0], sizes = [4, 32], strides = [1, 1]} : vector<4x128xf32> to vector<4x32xf32>
    %127 = arith.mulf %126, %123 : vector<4x32xf32>
    %128 = arith.addf %125, %127 : vector<4x32xf32>
    %129 = vector.extract_strided_slice %121 {offsets = [0, 96], sizes = [4, 32], strides = [1, 1]} : vector<4x128xf32> to vector<4x32xf32>
    %130 = math.tanh %128 : vector<4x32xf32>
    %131 = arith.mulf %129, %130 : vector<4x32xf32>
    %cst_33 = arith.constant dense<0.000000e+00> : vector<4x256xf32>
    %132 = tpu.matmul %116, %3, %cst_33 {dimension_numbers = #tpu.dot_dimension_numbers<[1], [0], [0], [1], [0, 0, 1, 1], [], []>} : vector<4x32xf32>, vector<32x256xf32>, vector<4x256xf32> -> vector<4x256xf32>
    %cst_34 = arith.constant dense<0.000000e+00> : vector<4x128xf32>
    %133 = tpu.matmul %131, %4, %cst_34 {dimension_numbers = #tpu.dot_dimension_numbers<[1], [0], [0], [1], [0, 0, 1, 1], [], []>} : vector<4x32xf32>, vector<32x128xf32>, vector<4x128xf32> -> vector<4x128xf32>
    %c3 = arith.constant 3 : index
    %c0_35 = arith.constant 0 : index
    %c0_36 = arith.constant 0 : index
    %134 = vector.load %arg1[%c3, %c0_35, %c0_36] : memref<8x4x128xf32, #tpu.memory_space<vmem>>, vector<1x4x128xf32>
    %135 = vector.shape_cast %134 : vector<1x4x128xf32> to vector<4x128xf32>
    %136 = vector.extract_strided_slice %132 {offsets = [0, 0], sizes = [4, 128], strides = [1, 1]} : vector<4x256xf32> to vector<4x128xf32>
    %137 = arith.addf %135, %136 : vector<4x128xf32>
    %138 = vector.extract_strided_slice %132 {offsets = [0, 128], sizes = [4, 128], strides = [1, 1]} : vector<4x256xf32> to vector<4x128xf32>
    %139 = arith.addf %138, %133 : vector<4x128xf32>
    %140 = arith.addf %139, %7 : vector<4x128xf32>
    %141 = arith.negf %137 : vector<4x128xf32>
    %142 = math.exp %141 : vector<4x128xf32>
    %cst_37 = arith.constant 1.000000e+00 : f32
    %143 = vector.broadcast %cst_37 : f32 to vector<4x128xf32>
    %144 = arith.addf %143, %142 : vector<4x128xf32>
    %145 = arith.divf %143, %144 : vector<4x128xf32>
    %146 = vector.extract_strided_slice %137 {offsets = [0, 64], sizes = [4, 32], strides = [1, 1]} : vector<4x128xf32> to vector<4x32xf32>
    %147 = math.tanh %146 : vector<4x32xf32>
    %148 = vector.extract_strided_slice %145 {offsets = [0, 32], sizes = [4, 32], strides = [1, 1]} : vector<4x128xf32> to vector<4x32xf32>
    %149 = arith.mulf %148, %113 : vector<4x32xf32>
    %150 = vector.extract_strided_slice %145 {offsets = [0, 0], sizes = [4, 32], strides = [1, 1]} : vector<4x128xf32> to vector<4x32xf32>
    %151 = arith.mulf %150, %147 : vector<4x32xf32>
    %152 = arith.addf %149, %151 : vector<4x32xf32>
    %153 = vector.extract_strided_slice %145 {offsets = [0, 96], sizes = [4, 32], strides = [1, 1]} : vector<4x128xf32> to vector<4x32xf32>
    %154 = math.tanh %152 : vector<4x32xf32>
    %155 = arith.mulf %153, %154 : vector<4x32xf32>
    %156 = arith.negf %140 : vector<4x128xf32>
    %157 = math.exp %156 : vector<4x128xf32>
    %cst_38 = arith.constant 1.000000e+00 : f32
    %158 = vector.broadcast %cst_38 : f32 to vector<4x128xf32>
    %159 = arith.addf %158, %157 : vector<4x128xf32>
    %160 = arith.divf %158, %159 : vector<4x128xf32>
    %161 = vector.extract_strided_slice %140 {offsets = [0, 64], sizes = [4, 32], strides = [1, 1]} : vector<4x128xf32> to vector<4x32xf32>
    %162 = math.tanh %161 : vector<4x32xf32>
    %163 = vector.extract_strided_slice %160 {offsets = [0, 32], sizes = [4, 32], strides = [1, 1]} : vector<4x128xf32> to vector<4x32xf32>
    %164 = arith.mulf %163, %128 : vector<4x32xf32>
    %165 = vector.extract_strided_slice %160 {offsets = [0, 0], sizes = [4, 32], strides = [1, 1]} : vector<4x128xf32> to vector<4x32xf32>
    %166 = arith.mulf %165, %162 : vector<4x32xf32>
    %167 = arith.addf %164, %166 : vector<4x32xf32>
    %168 = vector.extract_strided_slice %160 {offsets = [0, 96], sizes = [4, 32], strides = [1, 1]} : vector<4x128xf32> to vector<4x32xf32>
    %169 = math.tanh %167 : vector<4x32xf32>
    %170 = arith.mulf %168, %169 : vector<4x32xf32>
    %cst_39 = arith.constant dense<0.000000e+00> : vector<4x256xf32>
    %171 = tpu.matmul %155, %3, %cst_39 {dimension_numbers = #tpu.dot_dimension_numbers<[1], [0], [0], [1], [0, 0, 1, 1], [], []>} : vector<4x32xf32>, vector<32x256xf32>, vector<4x256xf32> -> vector<4x256xf32>
    %cst_40 = arith.constant dense<0.000000e+00> : vector<4x128xf32>
    %172 = tpu.matmul %170, %4, %cst_40 {dimension_numbers = #tpu.dot_dimension_numbers<[1], [0], [0], [1], [0, 0, 1, 1], [], []>} : vector<4x32xf32>, vector<32x128xf32>, vector<4x128xf32> -> vector<4x128xf32>
    %c4 = arith.constant 4 : index
    %c0_41 = arith.constant 0 : index
    %c0_42 = arith.constant 0 : index
    %173 = vector.load %arg1[%c4, %c0_41, %c0_42] : memref<8x4x128xf32, #tpu.memory_space<vmem>>, vector<1x4x128xf32>
    %174 = vector.shape_cast %173 : vector<1x4x128xf32> to vector<4x128xf32>
    %175 = vector.extract_strided_slice %171 {offsets = [0, 0], sizes = [4, 128], strides = [1, 1]} : vector<4x256xf32> to vector<4x128xf32>
    %176 = arith.addf %174, %175 : vector<4x128xf32>
    %177 = vector.extract_strided_slice %171 {offsets = [0, 128], sizes = [4, 128], strides = [1, 1]} : vector<4x256xf32> to vector<4x128xf32>
    %178 = arith.addf %177, %172 : vector<4x128xf32>
    %179 = arith.addf %178, %7 : vector<4x128xf32>
    %180 = arith.negf %176 : vector<4x128xf32>
    %181 = math.exp %180 : vector<4x128xf32>
    %cst_43 = arith.constant 1.000000e+00 : f32
    %182 = vector.broadcast %cst_43 : f32 to vector<4x128xf32>
    %183 = arith.addf %182, %181 : vector<4x128xf32>
    %184 = arith.divf %182, %183 : vector<4x128xf32>
    %185 = vector.extract_strided_slice %176 {offsets = [0, 64], sizes = [4, 32], strides = [1, 1]} : vector<4x128xf32> to vector<4x32xf32>
    %186 = math.tanh %185 : vector<4x32xf32>
    %187 = vector.extract_strided_slice %184 {offsets = [0, 32], sizes = [4, 32], strides = [1, 1]} : vector<4x128xf32> to vector<4x32xf32>
    %188 = arith.mulf %187, %152 : vector<4x32xf32>
    %189 = vector.extract_strided_slice %184 {offsets = [0, 0], sizes = [4, 32], strides = [1, 1]} : vector<4x128xf32> to vector<4x32xf32>
    %190 = arith.mulf %189, %186 : vector<4x32xf32>
    %191 = arith.addf %188, %190 : vector<4x32xf32>
    %192 = vector.extract_strided_slice %184 {offsets = [0, 96], sizes = [4, 32], strides = [1, 1]} : vector<4x128xf32> to vector<4x32xf32>
    %193 = math.tanh %191 : vector<4x32xf32>
    %194 = arith.mulf %192, %193 : vector<4x32xf32>
    %195 = arith.negf %179 : vector<4x128xf32>
    %196 = math.exp %195 : vector<4x128xf32>
    %cst_44 = arith.constant 1.000000e+00 : f32
    %197 = vector.broadcast %cst_44 : f32 to vector<4x128xf32>
    %198 = arith.addf %197, %196 : vector<4x128xf32>
    %199 = arith.divf %197, %198 : vector<4x128xf32>
    %200 = vector.extract_strided_slice %179 {offsets = [0, 64], sizes = [4, 32], strides = [1, 1]} : vector<4x128xf32> to vector<4x32xf32>
    %201 = math.tanh %200 : vector<4x32xf32>
    %202 = vector.extract_strided_slice %199 {offsets = [0, 32], sizes = [4, 32], strides = [1, 1]} : vector<4x128xf32> to vector<4x32xf32>
    %203 = arith.mulf %202, %167 : vector<4x32xf32>
    %204 = vector.extract_strided_slice %199 {offsets = [0, 0], sizes = [4, 32], strides = [1, 1]} : vector<4x128xf32> to vector<4x32xf32>
    %205 = arith.mulf %204, %201 : vector<4x32xf32>
    %206 = arith.addf %203, %205 : vector<4x32xf32>
    %207 = vector.extract_strided_slice %199 {offsets = [0, 96], sizes = [4, 32], strides = [1, 1]} : vector<4x128xf32> to vector<4x32xf32>
    %208 = math.tanh %206 : vector<4x32xf32>
    %209 = arith.mulf %207, %208 : vector<4x32xf32>
    %cst_45 = arith.constant dense<0.000000e+00> : vector<4x256xf32>
    %210 = tpu.matmul %194, %3, %cst_45 {dimension_numbers = #tpu.dot_dimension_numbers<[1], [0], [0], [1], [0, 0, 1, 1], [], []>} : vector<4x32xf32>, vector<32x256xf32>, vector<4x256xf32> -> vector<4x256xf32>
    %cst_46 = arith.constant dense<0.000000e+00> : vector<4x128xf32>
    %211 = tpu.matmul %209, %4, %cst_46 {dimension_numbers = #tpu.dot_dimension_numbers<[1], [0], [0], [1], [0, 0, 1, 1], [], []>} : vector<4x32xf32>, vector<32x128xf32>, vector<4x128xf32> -> vector<4x128xf32>
    %c5 = arith.constant 5 : index
    %c0_47 = arith.constant 0 : index
    %c0_48 = arith.constant 0 : index
    %212 = vector.load %arg1[%c5, %c0_47, %c0_48] : memref<8x4x128xf32, #tpu.memory_space<vmem>>, vector<1x4x128xf32>
    %213 = vector.shape_cast %212 : vector<1x4x128xf32> to vector<4x128xf32>
    %214 = vector.extract_strided_slice %210 {offsets = [0, 0], sizes = [4, 128], strides = [1, 1]} : vector<4x256xf32> to vector<4x128xf32>
    %215 = arith.addf %213, %214 : vector<4x128xf32>
    %216 = vector.extract_strided_slice %210 {offsets = [0, 128], sizes = [4, 128], strides = [1, 1]} : vector<4x256xf32> to vector<4x128xf32>
    %217 = arith.addf %216, %211 : vector<4x128xf32>
    %218 = arith.addf %217, %7 : vector<4x128xf32>
    %219 = arith.negf %215 : vector<4x128xf32>
    %220 = math.exp %219 : vector<4x128xf32>
    %cst_49 = arith.constant 1.000000e+00 : f32
    %221 = vector.broadcast %cst_49 : f32 to vector<4x128xf32>
    %222 = arith.addf %221, %220 : vector<4x128xf32>
    %223 = arith.divf %221, %222 : vector<4x128xf32>
    %224 = vector.extract_strided_slice %215 {offsets = [0, 64], sizes = [4, 32], strides = [1, 1]} : vector<4x128xf32> to vector<4x32xf32>
    %225 = math.tanh %224 : vector<4x32xf32>
    %226 = vector.extract_strided_slice %223 {offsets = [0, 32], sizes = [4, 32], strides = [1, 1]} : vector<4x128xf32> to vector<4x32xf32>
    %227 = arith.mulf %226, %191 : vector<4x32xf32>
    %228 = vector.extract_strided_slice %223 {offsets = [0, 0], sizes = [4, 32], strides = [1, 1]} : vector<4x128xf32> to vector<4x32xf32>
    %229 = arith.mulf %228, %225 : vector<4x32xf32>
    %230 = arith.addf %227, %229 : vector<4x32xf32>
    %231 = vector.extract_strided_slice %223 {offsets = [0, 96], sizes = [4, 32], strides = [1, 1]} : vector<4x128xf32> to vector<4x32xf32>
    %232 = math.tanh %230 : vector<4x32xf32>
    %233 = arith.mulf %231, %232 : vector<4x32xf32>
    %234 = arith.negf %218 : vector<4x128xf32>
    %235 = math.exp %234 : vector<4x128xf32>
    %cst_50 = arith.constant 1.000000e+00 : f32
    %236 = vector.broadcast %cst_50 : f32 to vector<4x128xf32>
    %237 = arith.addf %236, %235 : vector<4x128xf32>
    %238 = arith.divf %236, %237 : vector<4x128xf32>
    %239 = vector.extract_strided_slice %218 {offsets = [0, 64], sizes = [4, 32], strides = [1, 1]} : vector<4x128xf32> to vector<4x32xf32>
    %240 = math.tanh %239 : vector<4x32xf32>
    %241 = vector.extract_strided_slice %238 {offsets = [0, 32], sizes = [4, 32], strides = [1, 1]} : vector<4x128xf32> to vector<4x32xf32>
    %242 = arith.mulf %241, %206 : vector<4x32xf32>
    %243 = vector.extract_strided_slice %238 {offsets = [0, 0], sizes = [4, 32], strides = [1, 1]} : vector<4x128xf32> to vector<4x32xf32>
    %244 = arith.mulf %243, %240 : vector<4x32xf32>
    %245 = arith.addf %242, %244 : vector<4x32xf32>
    %246 = vector.extract_strided_slice %238 {offsets = [0, 96], sizes = [4, 32], strides = [1, 1]} : vector<4x128xf32> to vector<4x32xf32>
    %247 = math.tanh %245 : vector<4x32xf32>
    %248 = arith.mulf %246, %247 : vector<4x32xf32>
    %cst_51 = arith.constant dense<0.000000e+00> : vector<4x256xf32>
    %249 = tpu.matmul %233, %3, %cst_51 {dimension_numbers = #tpu.dot_dimension_numbers<[1], [0], [0], [1], [0, 0, 1, 1], [], []>} : vector<4x32xf32>, vector<32x256xf32>, vector<4x256xf32> -> vector<4x256xf32>
    %cst_52 = arith.constant dense<0.000000e+00> : vector<4x128xf32>
    %250 = tpu.matmul %248, %4, %cst_52 {dimension_numbers = #tpu.dot_dimension_numbers<[1], [0], [0], [1], [0, 0, 1, 1], [], []>} : vector<4x32xf32>, vector<32x128xf32>, vector<4x128xf32> -> vector<4x128xf32>
    %c6 = arith.constant 6 : index
    %c0_53 = arith.constant 0 : index
    %c0_54 = arith.constant 0 : index
    %251 = vector.load %arg1[%c6, %c0_53, %c0_54] : memref<8x4x128xf32, #tpu.memory_space<vmem>>, vector<1x4x128xf32>
    %252 = vector.shape_cast %251 : vector<1x4x128xf32> to vector<4x128xf32>
    %253 = vector.extract_strided_slice %249 {offsets = [0, 0], sizes = [4, 128], strides = [1, 1]} : vector<4x256xf32> to vector<4x128xf32>
    %254 = arith.addf %252, %253 : vector<4x128xf32>
    %255 = vector.extract_strided_slice %249 {offsets = [0, 128], sizes = [4, 128], strides = [1, 1]} : vector<4x256xf32> to vector<4x128xf32>
    %256 = arith.addf %255, %250 : vector<4x128xf32>
    %257 = arith.addf %256, %7 : vector<4x128xf32>
    %258 = arith.negf %254 : vector<4x128xf32>
    %259 = math.exp %258 : vector<4x128xf32>
    %cst_55 = arith.constant 1.000000e+00 : f32
    %260 = vector.broadcast %cst_55 : f32 to vector<4x128xf32>
    %261 = arith.addf %260, %259 : vector<4x128xf32>
    %262 = arith.divf %260, %261 : vector<4x128xf32>
    %263 = vector.extract_strided_slice %254 {offsets = [0, 64], sizes = [4, 32], strides = [1, 1]} : vector<4x128xf32> to vector<4x32xf32>
    %264 = math.tanh %263 : vector<4x32xf32>
    %265 = vector.extract_strided_slice %262 {offsets = [0, 32], sizes = [4, 32], strides = [1, 1]} : vector<4x128xf32> to vector<4x32xf32>
    %266 = arith.mulf %265, %230 : vector<4x32xf32>
    %267 = vector.extract_strided_slice %262 {offsets = [0, 0], sizes = [4, 32], strides = [1, 1]} : vector<4x128xf32> to vector<4x32xf32>
    %268 = arith.mulf %267, %264 : vector<4x32xf32>
    %269 = arith.addf %266, %268 : vector<4x32xf32>
    %270 = vector.extract_strided_slice %262 {offsets = [0, 96], sizes = [4, 32], strides = [1, 1]} : vector<4x128xf32> to vector<4x32xf32>
    %271 = math.tanh %269 : vector<4x32xf32>
    %272 = arith.mulf %270, %271 : vector<4x32xf32>
    %273 = arith.negf %257 : vector<4x128xf32>
    %274 = math.exp %273 : vector<4x128xf32>
    %cst_56 = arith.constant 1.000000e+00 : f32
    %275 = vector.broadcast %cst_56 : f32 to vector<4x128xf32>
    %276 = arith.addf %275, %274 : vector<4x128xf32>
    %277 = arith.divf %275, %276 : vector<4x128xf32>
    %278 = vector.extract_strided_slice %257 {offsets = [0, 64], sizes = [4, 32], strides = [1, 1]} : vector<4x128xf32> to vector<4x32xf32>
    %279 = math.tanh %278 : vector<4x32xf32>
    %280 = vector.extract_strided_slice %277 {offsets = [0, 32], sizes = [4, 32], strides = [1, 1]} : vector<4x128xf32> to vector<4x32xf32>
    %281 = arith.mulf %280, %245 : vector<4x32xf32>
    %282 = vector.extract_strided_slice %277 {offsets = [0, 0], sizes = [4, 32], strides = [1, 1]} : vector<4x128xf32> to vector<4x32xf32>
    %283 = arith.mulf %282, %279 : vector<4x32xf32>
    %284 = arith.addf %281, %283 : vector<4x32xf32>
    %285 = vector.extract_strided_slice %277 {offsets = [0, 96], sizes = [4, 32], strides = [1, 1]} : vector<4x128xf32> to vector<4x32xf32>
    %286 = math.tanh %284 : vector<4x32xf32>
    %287 = arith.mulf %285, %286 : vector<4x32xf32>
    %cst_57 = arith.constant dense<0.000000e+00> : vector<4x256xf32>
    %288 = tpu.matmul %272, %3, %cst_57 {dimension_numbers = #tpu.dot_dimension_numbers<[1], [0], [0], [1], [0, 0, 1, 1], [], []>} : vector<4x32xf32>, vector<32x256xf32>, vector<4x256xf32> -> vector<4x256xf32>
    %cst_58 = arith.constant dense<0.000000e+00> : vector<4x128xf32>
    %289 = tpu.matmul %287, %4, %cst_58 {dimension_numbers = #tpu.dot_dimension_numbers<[1], [0], [0], [1], [0, 0, 1, 1], [], []>} : vector<4x32xf32>, vector<32x128xf32>, vector<4x128xf32> -> vector<4x128xf32>
    %c7 = arith.constant 7 : index
    %c0_59 = arith.constant 0 : index
    %c0_60 = arith.constant 0 : index
    %290 = vector.load %arg1[%c7, %c0_59, %c0_60] : memref<8x4x128xf32, #tpu.memory_space<vmem>>, vector<1x4x128xf32>
    %291 = vector.shape_cast %290 : vector<1x4x128xf32> to vector<4x128xf32>
    %292 = vector.extract_strided_slice %288 {offsets = [0, 0], sizes = [4, 128], strides = [1, 1]} : vector<4x256xf32> to vector<4x128xf32>
    %293 = arith.addf %291, %292 : vector<4x128xf32>
    %294 = vector.extract_strided_slice %288 {offsets = [0, 128], sizes = [4, 128], strides = [1, 1]} : vector<4x256xf32> to vector<4x128xf32>
    %295 = arith.addf %294, %289 : vector<4x128xf32>
    %296 = arith.addf %295, %7 : vector<4x128xf32>
    %297 = arith.negf %293 : vector<4x128xf32>
    %298 = math.exp %297 : vector<4x128xf32>
    %cst_61 = arith.constant 1.000000e+00 : f32
    %299 = vector.broadcast %cst_61 : f32 to vector<4x128xf32>
    %300 = arith.addf %299, %298 : vector<4x128xf32>
    %301 = arith.divf %299, %300 : vector<4x128xf32>
    %302 = vector.extract_strided_slice %293 {offsets = [0, 64], sizes = [4, 32], strides = [1, 1]} : vector<4x128xf32> to vector<4x32xf32>
    %303 = math.tanh %302 : vector<4x32xf32>
    %304 = vector.extract_strided_slice %301 {offsets = [0, 32], sizes = [4, 32], strides = [1, 1]} : vector<4x128xf32> to vector<4x32xf32>
    %305 = arith.mulf %304, %269 : vector<4x32xf32>
    %306 = vector.extract_strided_slice %301 {offsets = [0, 0], sizes = [4, 32], strides = [1, 1]} : vector<4x128xf32> to vector<4x32xf32>
    %307 = arith.mulf %306, %303 : vector<4x32xf32>
    %308 = arith.addf %305, %307 : vector<4x32xf32>
    %309 = vector.extract_strided_slice %301 {offsets = [0, 96], sizes = [4, 32], strides = [1, 1]} : vector<4x128xf32> to vector<4x32xf32>
    %310 = math.tanh %308 : vector<4x32xf32>
    %311 = arith.mulf %309, %310 : vector<4x32xf32>
    %312 = arith.negf %296 : vector<4x128xf32>
    %313 = math.exp %312 : vector<4x128xf32>
    %cst_62 = arith.constant 1.000000e+00 : f32
    %314 = vector.broadcast %cst_62 : f32 to vector<4x128xf32>
    %315 = arith.addf %314, %313 : vector<4x128xf32>
    %316 = arith.divf %314, %315 : vector<4x128xf32>
    %317 = vector.extract_strided_slice %296 {offsets = [0, 64], sizes = [4, 32], strides = [1, 1]} : vector<4x128xf32> to vector<4x32xf32>
    %318 = math.tanh %317 : vector<4x32xf32>
    %319 = vector.extract_strided_slice %316 {offsets = [0, 32], sizes = [4, 32], strides = [1, 1]} : vector<4x128xf32> to vector<4x32xf32>
    %320 = arith.mulf %319, %284 : vector<4x32xf32>
    %321 = vector.extract_strided_slice %316 {offsets = [0, 0], sizes = [4, 32], strides = [1, 1]} : vector<4x128xf32> to vector<4x32xf32>
    %322 = arith.mulf %321, %318 : vector<4x32xf32>
    %323 = arith.addf %320, %322 : vector<4x32xf32>
    %324 = vector.extract_strided_slice %316 {offsets = [0, 96], sizes = [4, 32], strides = [1, 1]} : vector<4x128xf32> to vector<4x32xf32>
    %325 = math.tanh %323 : vector<4x32xf32>
    %326 = arith.mulf %324, %325 : vector<4x32xf32>
    %c0_63 = arith.constant 0 : index
    %c0_64 = arith.constant 0 : index
    %327 = vector.load %arg6[%c0_63, %c0_64] : memref<4x32xf32, #tpu.memory_space<vmem>>, vector<4x32xf32>
    tpu.vector_store %arg6[%c0_63, %c0_64], %311 {strides = array<i32>} : memref<4x32xf32, #tpu.memory_space<vmem>>, vector<4x32xf32>,
    %c0_65 = arith.constant 0 : index
    %c0_66 = arith.constant 0 : index
    %328 = vector.load %arg7[%c0_65, %c0_66] : memref<4x32xf32, #tpu.memory_space<vmem>>, vector<4x32xf32>
    tpu.vector_store %arg7[%c0_65, %c0_66], %308 {strides = array<i32>} : memref<4x32xf32, #tpu.memory_space<vmem>>, vector<4x32xf32>,
    %c0_67 = arith.constant 0 : index
    %c0_68 = arith.constant 0 : index
    %329 = vector.load %arg8[%c0_67, %c0_68] : memref<4x32xf32, #tpu.memory_space<vmem>>, vector<4x32xf32>
    tpu.vector_store %arg8[%c0_67, %c0_68], %326 {strides = array<i32>} : memref<4x32xf32, #tpu.memory_space<vmem>>, vector<4x32xf32>,
    %c0_69 = arith.constant 0 : index
    %c0_70 = arith.constant 0 : index
    %330 = vector.load %arg9[%c0_69, %c0_70] : memref<4x32xf32, #tpu.memory_space<vmem>>, vector<4x32xf32>
    tpu.vector_store %arg9[%c0_69, %c0_70], %323 {strides = array<i32>} : memref<4x32xf32, #tpu.memory_space<vmem>>, vector<4x32xf32>,
    %c0_i32_71 = arith.constant 0 : i32
    %331 = arith.cmpi eq, %arg0, %c0_i32_71 : i32
    %332 = arith.extui %331 : i1 to i32
    %c0_i32_72 = arith.constant 0 : i32
    %333 = arith.cmpi ne, %332, %c0_i32_72 : i32
    scf.if %333 {
      %334 = vector.extract_strided_slice %3 {offsets = [0, 128], sizes = [32, 128], strides = [1, 1]} : vector<32x256xf32> to vector<32x128xf32>
      %cst_73 = arith.constant dense<0.000000e+00> : vector<4x128xf32>
      %335 = tpu.matmul %311, %334, %cst_73 {dimension_numbers = #tpu.dot_dimension_numbers<[1], [0], [0], [1], [0, 0, 1, 1], [], []>} : vector<4x32xf32>, vector<32x128xf32>, vector<4x128xf32> -> vector<4x128xf32>
      %cst_74 = arith.constant dense<0.000000e+00> : vector<4x128xf32>
      %336 = tpu.matmul %326, %4, %cst_74 {dimension_numbers = #tpu.dot_dimension_numbers<[1], [0], [0], [1], [0, 0, 1, 1], [], []>} : vector<4x32xf32>, vector<32x128xf32>, vector<4x128xf32> -> vector<4x128xf32>
      %337 = arith.addf %335, %336 : vector<4x128xf32>
      %338 = arith.addf %337, %7 : vector<4x128xf32>
      %339 = arith.negf %338 : vector<4x128xf32>
      %340 = math.exp %339 : vector<4x128xf32>
      %cst_75 = arith.constant 1.000000e+00 : f32
      %341 = vector.broadcast %cst_75 : f32 to vector<4x128xf32>
      %342 = arith.addf %341, %340 : vector<4x128xf32>
      %343 = arith.divf %341, %342 : vector<4x128xf32>
      %344 = vector.extract_strided_slice %338 {offsets = [0, 64], sizes = [4, 32], strides = [1, 1]} : vector<4x128xf32> to vector<4x32xf32>
      %345 = math.tanh %344 : vector<4x32xf32>
      %346 = vector.extract_strided_slice %343 {offsets = [0, 32], sizes = [4, 32], strides = [1, 1]} : vector<4x128xf32> to vector<4x32xf32>
      %347 = arith.mulf %346, %323 : vector<4x32xf32>
      %348 = vector.extract_strided_slice %343 {offsets = [0, 0], sizes = [4, 32], strides = [1, 1]} : vector<4x128xf32> to vector<4x32xf32>
      %349 = arith.mulf %348, %345 : vector<4x32xf32>
      %350 = arith.addf %347, %349 : vector<4x32xf32>
      %351 = vector.extract_strided_slice %343 {offsets = [0, 96], sizes = [4, 32], strides = [1, 1]} : vector<4x128xf32> to vector<4x32xf32>
      %352 = math.tanh %350 : vector<4x32xf32>
      %353 = arith.mulf %351, %352 : vector<4x32xf32>
      %c0_76 = arith.constant 0 : index
      %c0_77 = arith.constant 0 : index
      %354 = vector.load %arg5[%c0_76, %c0_77] : memref<4x32xf32, #tpu.memory_space<vmem>>, vector<4x32xf32>
      tpu.vector_store %arg5[%c0_76, %c0_77], %353 {strides = array<i32>} : memref<4x32xf32, #tpu.memory_space<vmem>>, vector<4x32xf32>,
    } else {
    }
    return
  }
  func.func @transform_0(%arg0: i32) -> (i32, i32, i32) {
    %c0_i32 = arith.constant 0 : i32
    %c0_i32_0 = arith.constant 0 : i32
    %c0_i32_1 = arith.constant 0 : i32
    return %arg0, %c0_i32, %c0_i32_0 : i32, i32, i32
  }
  func.func @transform_1(%arg0: i32) -> (i32, i32) {
    %c0_i32 = arith.constant 0 : i32
    %c0_i32_0 = arith.constant 0 : i32
    %c0_i32_1 = arith.constant 0 : i32
    return %c0_i32, %c0_i32_0 : i32, i32
  }
  func.func @transform_2(%arg0: i32) -> (i32, i32) {
    %c0_i32 = arith.constant 0 : i32
    %c0_i32_0 = arith.constant 0 : i32
    %c0_i32_1 = arith.constant 0 : i32
    return %c0_i32, %c0_i32_0 : i32, i32
  }
  func.func @transform_3(%arg0: i32) -> (i32, i32) {
    %c0_i32 = arith.constant 0 : i32
    %c0_i32_0 = arith.constant 0 : i32
    %c0_i32_1 = arith.constant 0 : i32
    return %c0_i32, %c0_i32_0 : i32, i32
  }
  func.func @transform_4(%arg0: i32) -> (i32, i32) {
    %c0_i32 = arith.constant 0 : i32
    %c0_i32_0 = arith.constant 0 : i32
    %c0_i32_1 = arith.constant 0 : i32
    return %c0_i32, %c0_i32_0 : i32, i32
  }
}

</mosaic_0001>

<llo_original>
// kernel: tpu_custom_call.1
$region0: #{tpu_custom_call.1}
  #allocation0 [shape = 'u32[]', space=smem, size = 0x4, offset = 0x4, fixed_abs, tag = 'smem constant byte address 0x4 - core index']
  #allocation1 [shape = 'u32[72,128]{1,0:T(1,128)}', space=vmem, size = 0x9000, scoped, tag = 'internal scratch']
  #allocation2 [shape = 'f32[4,32]{1,0:T(4,128)}', space=vmem, size = 0x800, scoped, tag = 'scratch operand']
  #allocation3 [shape = 'f32[4,32]{1,0:T(4,128)}', space=vmem, size = 0x800, scoped, tag = 'scratch operand']
  #allocation4 [shape = 'f32[4,32]{1,0:T(4,128)}', space=vmem, size = 0x800, scoped, tag = 'scratch operand']
  #allocation5 [shape = 'f32[4,32]{1,0:T(4,128)}', space=vmem, size = 0x800, scoped, tag = 'scratch operand']
  %s0 = inlined_call_operand.hbm [shape: f32[8,4,128], index: 0, kind: input, shape index: {}]
  %s1 = inlined_call_operand.hbm [shape: f32[32,256], index: 1, kind: input, shape index: {}]
  %s2 = inlined_call_operand.hbm [shape: f32[32,128], index: 2, kind: input, shape index: {}]
  %s3 = inlined_call_operand.vmem [shape: f32[1,128], index: 3, kind: input, shape index: {}]
  %s4 = inlined_call_operand.hbm [shape: f32[4,32], index: 4, kind: output, shape index: {}]
  %s5 = sld [smem:[#allocation0]]
  $region46: #{tpu_custom_call.1} parent=0
    _
  %s7 = ssub.s32 1, %s5
  %s8 = scalar_select 0, %s7, %s5
  $region1: #{tpu_custom_call.1} parent=0
    #allocation6 [shape = 'u8[16384]{0}', space=vmem, size = 0x4000, scoped, tag = 'input window, operand 0, single buffered']
    #allocation7 [shape = 's32[1]{0}', space=sflag, size = 0x4, scoped, tag = 'scoped memory for tpu_custom_call.1']
    #allocation8 [shape = 's32[1]{0}', space=sflag, size = 0x4, scoped, tag = 'scoped memory for tpu_custom_call.1']
    #allocation9 [shape = 'u8[32768]{0}', space=vmem, size = 0x8000, scoped, tag = 'input window, operand 1, single buffered']
    #allocation10 [shape = 's32[1]{0}', space=sflag, size = 0x4, scoped, tag = 'scoped memory for tpu_custom_call.1']
    #allocation11 [shape = 'u8[16384]{0}', space=vmem, size = 0x4000, scoped, tag = 'input window, operand 2, single buffered']
    #allocation12 [shape = 'u8[2048]{0}', space=vmem, size = 0x800, scoped, tag = 'output window, operand 0, single buffered']
    %9 = vsyncpa [#allocation7], 0
    %10 = vsyncpa [#allocation10], 0
    %11 = vsyncpa [#allocation8], 0
    // Predicated region
    $region2: #{tpu_custom_call.1} parent=1 // pred_check
      _
    $region3: #{tpu_custom_call.1} parent=1 // pred_check_branch
      %13 = sbr.rel (0) target = $region5
    $region4: #{tpu_custom_call.1} parent=1 // pred_region
      %15 = vsyncadd [#allocation7], 0
      %s16 = sshll.u32 %s0, 4
      %s17 = int_to_ptr.hbm [resolvable:$true] %s16
      %s18 = sshll.u32 [#allocation6], 4
      %s19 = int_to_ptr.vmem [resolvable:$true] %s18
      %24 = dma.hbm_to_vmem [thread:$0]  %s17, 512, %s19, [#allocation7], 64, 64, 4
    $region5: #{tpu_custom_call.1} parent=1 // pred_fallthru
      _
    // Predicated region
    $region6: #{tpu_custom_call.1} parent=1 // pred_check
      _
    $region7: #{tpu_custom_call.1} parent=1 // pred_check_branch
      %26 = sbr.rel (0) target = $region9
    $region8: #{tpu_custom_call.1} parent=1 // pred_region
      %28 = vsyncadd [#allocation10], 0
      %s29 = sshll.u32 %s1, 4
      %s30 = int_to_ptr.hbm [resolvable:$true] %s29
      %s31 = sshll.u32 [#allocation9], 4
      %s32 = int_to_ptr.vmem [resolvable:$true] %s31
      %37 = dma.hbm_to_vmem [thread:$0]  %s30, 1024, %s32, [#allocation10], 256, 256, 16
    $region9: #{tpu_custom_call.1} parent=1 // pred_fallthru
      _
    // Predicated region
    $region10: #{tpu_custom_call.1} parent=1 // pred_check
      _
    $region11: #{tpu_custom_call.1} parent=1 // pred_check_branch
      %39 = sbr.rel (0) target = $region13
    $region12: #{tpu_custom_call.1} parent=1 // pred_region
      %41 = vsyncadd [#allocation10], 0
      %s42 = sshll.u32 %s2, 4
      %s43 = int_to_ptr.hbm [resolvable:$true] %s42
      %s44 = sshll.u32 [#allocation11], 4
      %s45 = int_to_ptr.vmem [resolvable:$true] %s44
      %50 = dma.hbm_to_vmem [thread:$0]  %s43, 512, %s45, [#allocation10], 128, 128, 8
    $region13: #{tpu_custom_call.1} parent=1 // pred_fallthru
      _
    // Predicated region
    $region14: #{tpu_custom_call.1} parent=1 // pred_check
      _
    $region15: #{tpu_custom_call.1} parent=1 // pred_check_branch
      %52 = sbr.rel (0) target = $region17
    $region16: #{tpu_custom_call.1} parent=1 // pred_region
      _
    $region17: #{tpu_custom_call.1} parent=1 // pred_fallthru
      _
    // Predicated region
    $region18: #{tpu_custom_call.1} parent=1 // pred_check
      _
    $region19: #{tpu_custom_call.1} parent=1 // pred_check_branch
      %54 = sbr.rel (0) target = $region21
    $region20: #{tpu_custom_call.1} parent=1 // pred_region
      %56 = dma.done [#allocation7], 512
    $region21: #{tpu_custom_call.1} parent=1 // pred_fallthru
      _
    // Predicated region
    $region22: #{tpu_custom_call.1} parent=1 // pred_check
      _
    $region23: #{tpu_custom_call.1} parent=1 // pred_check_branch
      %58 = sbr.rel (0) target = $region25
    $region24: #{tpu_custom_call.1} parent=1 // pred_region
      %60 = dma.done [#allocation10], 1024
    $region25: #{tpu_custom_call.1} parent=1 // pred_fallthru
      _
    // Predicated region
    $region26: #{tpu_custom_call.1} parent=1 // pred_check
      _
    $region27: #{tpu_custom_call.1} parent=1 // pred_check_branch
      %62 = sbr.rel (0) target = $region29
    $region28: #{tpu_custom_call.1} parent=1 // pred_region
      %64 = dma.done [#allocation10], 512
    $region29: #{tpu_custom_call.1} parent=1 // pred_fallthru
      _
    %p65 = scmp.eq.s32.totalorder 0, 0
    // Predicated region
    $region30: #{tpu_custom_call.1} parent=1 // pred_check
      %p66 = pneg %p65
    $region31: #{tpu_custom_call.1} parent=1 // pred_check_branch
      %68 = sbr.rel (%p66) target = $region33
    $region32: #{tpu_custom_call.1} parent=1 // pred_region
      %vm69 = vcmask 257024
      %70 = vst.msk [vmem:[#allocation2] sm:$0xf] %vm69, 0.0
      %71 = vst.msk [vmem:[#allocation3] sm:$0xf] %vm69, 0.0
      %72 = vst.msk [vmem:[#allocation4] sm:$0xf] %vm69, 0.0
      %73 = vst.msk [vmem:[#allocation5] sm:$0xf] %vm69, 0.0
    $region33: #{tpu_custom_call.1} parent=1 // pred_fallthru
      _
    %v74 = vld [vmem:[#allocation9] sm:$0xff]
    %v75 = vld [vmem:[#allocation9 + $0x8] sm:$0xff]
    %v76 = vld [vmem:[#allocation9 + $0x10] sm:$0xff]
    %v77 = vld [vmem:[#allocation9 + $0x18] sm:$0xff]
    %v78 = vld [vmem:[#allocation9 + $0x20] sm:$0xff]
    %v79 = vld [vmem:[#allocation9 + $0x28] sm:$0xff]
    %v80 = vld [vmem:[#allocation9 + $0x30] sm:$0xff]
    %v81 = vld [vmem:[#allocation9 + $0x38] sm:$0xff]
    %v82 = vld [vmem:[#allocation11] sm:$0xff]
    %v83 = vld [vmem:[#allocation11 + $0x8] sm:$0xff]
    %v84 = vld [vmem:[#allocation11 + $0x10] sm:$0xff]
    %v85 = vld [vmem:[#allocation11 + $0x18] sm:$0xff]
    %v86 = vld [vmem:[%s3] sm:$0x1]
    %v88 = vperm.slane %v86, 0
    %v90 = vld [vmem:[#allocation2] sm:$0xf]
    %v91 = vld [vmem:[#allocation3] sm:$0xf]
    %v92 = vld [vmem:[#allocation4] sm:$0xf]
    %v93 = vld [vmem:[#allocation5] sm:$0xf]
    %vm94 = vcmask 261120
    %v96 = vsel %vm94, %v90, 0
    %98 = vmatpush.msra.mxu0 0.0
    %99 = vmatpush.msra.mxu0 0.0
    %100 = vmatpush.msra.mxu0 0.0
    %101 = vmatpush.msra.mxu0 0.0
    %102 = vmatpush.msra.mxu0 0.0
    %103 = vmatpush.msra.mxu0 0.0
    %104 = vmatpush.msra.mxu0 0.0
    %105 = vmatpush.msra.mxu0 0.0
    %106 = vmatpush.msra.mxu0 0.0
    %107 = vmatpush.msra.mxu0 0.0
    %108 = vmatpush.msra.mxu0 0.0
    %109 = vmatpush.msra.mxu0 0.0
    %110 = vmatpush.msra.mxu0 %v80
    %111 = vmatpush.msra.mxu0 %v78
    %112 = vmatpush.msra.mxu0 %v76
    %113 = vmatpush.msra.mxu0 %v74
    %114 = vmatmul.f32.gmra.mxu0 %v96
    %v115 = vpop.f32.mrf.mxu0
    %v116 = vadd.f32 0.0, %v115
    %117 = vdwg.mxu0
    %118 = vmatpush.msra.mxu0 0.0
    %119 = vmatpush.msra.mxu0 0.0
    %120 = vmatpush.msra.mxu0 0.0
    %121 = vmatpush.msra.mxu0 0.0
    %122 = vmatpush.msra.mxu0 0.0
    %123 = vmatpush.msra.mxu0 0.0
    %124 = vmatpush.msra.mxu0 0.0
    %125 = vmatpush.msra.mxu0 0.0
    %126 = vmatpush.msra.mxu0 0.0
    %127 = vmatpush.msra.mxu0 0.0
    %128 = vmatpush.msra.mxu0 0.0
    %129 = vmatpush.msra.mxu0 0.0
    %130 = vmatpush.msra.mxu0 %v81
    %131 = vmatpush.msra.mxu0 %v79
    %132 = vmatpush.msra.mxu0 %v77
    %133 = vmatpush.msra.mxu0 %v75
    %134 = vmatmul.f32.gmra.mxu0 %v96
    %v135 = vpop.f32.mrf.mxu0
    %v136 = vadd.f32 0.0, %v135
    %137 = vdwg.mxu0
    %v139 = vsel %vm94, %v92, 0
    %141 = vmatpush.msra.mxu0 0.0
    %142 = vmatpush.msra.mxu0 0.0
    %143 = vmatpush.msra.mxu0 0.0
    %144 = vmatpush.msra.mxu0 0.0
    %145 = vmatpush.msra.mxu0 0.0
    %146 = vmatpush.msra.mxu0 0.0
    %147 = vmatpush.msra.mxu0 0.0
    %148 = vmatpush.msra.mxu0 0.0
    %149 = vmatpush.msra.mxu0 0.0
    %150 = vmatpush.msra.mxu0 0.0
    %151 = vmatpush.msra.mxu0 0.0
    %152 = vmatpush.msra.mxu0 0.0
    %153 = vmatpush.msra.mxu0 %v85
    %154 = vmatpush.msra.mxu0 %v84
    %155 = vmatpush.msra.mxu0 %v83
    %156 = vmatpush.msra.mxu0 %v82
    %157 = vmatmul.f32.gmra.mxu0 %v139
    %v158 = vpop.f32.mrf.mxu0
    %v159 = vadd.f32 0.0, %v158
    %160 = vdwg.mxu0
    %v161 = vld [vmem:[#allocation6] sm:$0xf]
    %v162 = vadd.f32 %v161, %v116
    %v163 = vadd.f32 %v136, %v159
    %v164 = vadd.f32 %v163, %v88
    %v165 = vxor.u32 %v162, 2147483648
    %v166 = vmul.f32 %v165, 1.442695
    %v167 = vpow.pop %v166
    %v168 = vadd.f32 %v167, 1.0
    %v169 = vrcp.pop %v168
    %v170 = vmul.f32 %v168, %v169
    %v171 = vsub.f32 1.0, %v170
    %v172 = vmul.f32 %v169, %v171
    %v173 = vadd.f32 %v169, %v172
    %vm174 = vweird.f32 %v168
    %vm175 = vweird.f32 %v169
    %vm176 = vmor %vm174, %vm175
    %v177 = vsel %vm176, %v169, %v173
    %v178 = vand.u32 2147483647, %v168
    %vm179 = vcmp.eq.f32.partialorder %v178, 8.507059e+37
    %v180 = vand.u32 %v168, 2147483648
    %v181 = vor.u32 1.1754944e-38, %v180
    %v182 = vsel %vm179, %v181, %v177
    %v183 = vmul.f32 1.0, %v182
    %v184 = vtanh.pop %v162
    %186 = vrot.lane.b32.xlu0 %v91, 32
    %v187 = vpop.permute.xlu0 %186
    %v189 = vmul.f32 %v183, %v187
    %191 = vrot.lane.b32.xlu0 %v184, 64
    %v192 = vpop.permute.xlu0 %191
    %v194 = vmul.f32 %v183, %v192
    %196 = vrot.lane.b32.xlu0 %v194, 32
    %v197 = vpop.permute.xlu0 %196
    %v199 = vadd.f32 %v189, %v197
    %v200 = vtanh.pop %v199
    %202 = vrot.lane.b32.xlu0 %v200, 64
    %v203 = vpop.permute.xlu0 %202
    %v205 = vmul.f32 %v183, %v203
    %v206 = vxor.u32 %v164, 2147483648
    %v207 = vmul.f32 %v206, 1.442695
    %v208 = vpow.pop %v207
    %v209 = vadd.f32 %v208, 1.0
    %v210 = vrcp.pop %v209
    %v211 = vmul.f32 %v209, %v210
    %v212 = vsub.f32 1.0, %v211
    %v213 = vmul.f32 %v210, %v212
    %v214 = vadd.f32 %v210, %v213
    %vm215 = vweird.f32 %v209
    %vm216 = vweird.f32 %v210
    %vm217 = vmor %vm215, %vm216
    %v218 = vsel %vm217, %v210, %v214
    %v219 = vand.u32 2147483647, %v209
    %vm220 = vcmp.eq.f32.partialorder %v219, 8.507059e+37
    %v221 = vand.u32 %v209, 2147483648
    %v222 = vor.u32 1.1754944e-38, %v221
    %v223 = vsel %vm220, %v222, %v218
    %v224 = vmul.f32 1.0, %v223
    %v225 = vtanh.pop %v164
    %227 = vrot.lane.b32.xlu0 %v93, 32
    %v228 = vpop.permute.xlu0 %227
    %v230 = vmul.f32 %v224, %v228
    %232 = vrot.lane.b32.xlu0 %v225, 64
    %v233 = vpop.permute.xlu0 %232
    %v235 = vmul.f32 %v224, %v233
    %237 = vrot.lane.b32.xlu0 %v235, 32
    %v238 = vpop.permute.xlu0 %237
    %v240 = vadd.f32 %v230, %v238
    %v241 = vtanh.pop %v240
    %243 = vrot.lane.b32.xlu0 %v241, 64
    %v244 = vpop.permute.xlu0 %243
    %v246 = vmul.f32 %v224, %v244
    %p247 = scmp.gt.s32.totalorder 0, 0
    %s248 = scalar_select %p247, 1, 0
    %v249 = vstv %s248
    %vm250 = vcmp.eq.s32.totalorder %v249, 1
    %251 = vrot.lane.b32.xlu0 %v92, 96
    %v252 = vpop.permute.xlu0 %251
    %v254 = vsel %vm250, %v246, %v252
    %v255 = vsel %vm250, %v240, %v228
    %257 = vrot.lane.b32.xlu0 %v205, 32
    %v258 = vpop.permute.xlu0 %257
    %v259 = vsel %vm94, %v258, 0
    %261 = vmatpush.msra.mxu0 0.0
    %262 = vmatpush.msra.mxu0 0.0
    %263 = vmatpush.msra.mxu0 0.0
    %264 = vmatpush.msra.mxu0 0.0
    %265 = vmatpush.msra.mxu0 0.0
    %266 = vmatpush.msra.mxu0 0.0
    %267 = vmatpush.msra.mxu0 0.0
    %268 = vmatpush.msra.mxu0 0.0
    %269 = vmatpush.msra.mxu0 0.0
    %270 = vmatpush.msra.mxu0 0.0
    %271 = vmatpush.msra.mxu0 0.0
    %272 = vmatpush.msra.mxu0 0.0
    %273 = vmatpush.msra.mxu0 %v80
    %274 = vmatpush.msra.mxu0 %v78
    %275 = vmatpush.msra.mxu0 %v76
    %276 = vmatpush.msra.mxu0 %v74
    %277 = vmatmul.f32.gmra.mxu0 %v259
    %v278 = vpop.f32.mrf.mxu0
    %v279 = vadd.f32 0.0, %v278
    %280 = vdwg.mxu0
    %281 = vmatpush.msra.mxu0 0.0
    %282 = vmatpush.msra.mxu0 0.0
    %283 = vmatpush.msra.mxu0 0.0
    %284 = vmatpush.msra.mxu0 0.0
    %285 = vmatpush.msra.mxu0 0.0
    %286 = vmatpush.msra.mxu0 0.0
    %287 = vmatpush.msra.mxu0 0.0
    %288 = vmatpush.msra.mxu0 0.0
    %289 = vmatpush.msra.mxu0 0.0
    %290 = vmatpush.msra.mxu0 0.0
    %291 = vmatpush.msra.mxu0 0.0
    %292 = vmatpush.msra.mxu0 0.0
    %293 = vmatpush.msra.mxu0 %v81
    %294 = vmatpush.msra.mxu0 %v79
    %295 = vmatpush.msra.mxu0 %v77
    %296 = vmatpush.msra.mxu0 %v75
    %297 = vmatmul.f32.gmra.mxu0 %v259
    %v298 = vpop.f32.mrf.mxu0
    %v299 = vadd.f32 0.0, %v298
    %300 = vdwg.mxu0
    %302 = vrot.lane.b32.xlu0 %v254, 32
    %v303 = vpop.permute.xlu0 %302
    %v304 = vsel %vm94, %v303, 0
    %306 = vmatpush.msra.mxu0 0.0
    %307 = vmatpush.msra.mxu0 0.0
    %308 = vmatpush.msra.mxu0 0.0
    %309 = vmatpush.msra.mxu0 0.0
    %310 = vmatpush.msra.mxu0 0.0
    %311 = vmatpush.msra.mxu0 0.0
    %312 = vmatpush.msra.mxu0 0.0
    %313 = vmatpush.msra.mxu0 0.0
    %314 = vmatpush.msra.mxu0 0.0
    %315 = vmatpush.msra.mxu0 0.0
    %316 = vmatpush.msra.mxu0 0.0
    %317 = vmatpush.msra.mxu0 0.0
    %318 = vmatpush.msra.mxu0 %v85
    %319 = vmatpush.msra.mxu0 %v84
    %320 = vmatpush.msra.mxu0 %v83
    %321 = vmatpush.msra.mxu0 %v82
    %322 = vmatmul.f32.gmra.mxu0 %v304
    %v323 = vpop.f32.mrf.mxu0
    %v324 = vadd.f32 0.0, %v323
    %325 = vdwg.mxu0
    %s326 = scalar_lea.vmem [#allocation6], 4
    %v327 = vld [vmem:[%s326] sm:$0xf]
    %v328 = vadd.f32 %v327, %v279
    %v329 = vadd.f32 %v299, %v324
    %v330 = vadd.f32 %v329, %v88
    %v331 = vxor.u32 %v328, 2147483648
    %v332 = vmul.f32 %v331, 1.442695
    %v333 = vpow.pop %v332
    %v334 = vadd.f32 %v333, 1.0
    %v335 = vrcp.pop %v334
    %v336 = vmul.f32 %v334, %v335
    %v337 = vsub.f32 1.0, %v336
    %v338 = vmul.f32 %v335, %v337
    %v339 = vadd.f32 %v335, %v338
    %vm340 = vweird.f32 %v334
    %vm341 = vweird.f32 %v335
    %vm342 = vmor %vm340, %vm341
    %v343 = vsel %vm342, %v335, %v339
    %v344 = vand.u32 2147483647, %v334
    %vm345 = vcmp.eq.f32.partialorder %v344, 8.507059e+37
    %v346 = vand.u32 %v334, 2147483648
    %v347 = vor.u32 1.1754944e-38, %v346
    %v348 = vsel %vm345, %v347, %v343
    %v349 = vmul.f32 1.0, %v348
    %v350 = vtanh.pop %v328
    %v351 = vmul.f32 %v349, %v199
    %353 = vrot.lane.b32.xlu0 %v350, 64
    %v354 = vpop.permute.xlu0 %353
    %v356 = vmul.f32 %v349, %v354
    %358 = vrot.lane.b32.xlu0 %v356, 32
    %v359 = vpop.permute.xlu0 %358
    %v361 = vadd.f32 %v351, %v359
    %v362 = vtanh.pop %v361
    %364 = vrot.lane.b32.xlu0 %v362, 64
    %v365 = vpop.permute.xlu0 %364
    %v367 = vmul.f32 %v349, %v365
    %v368 = vxor.u32 %v330, 2147483648
    %v369 = vmul.f32 %v368, 1.442695
    %v370 = vpow.pop %v369
    %v371 = vadd.f32 %v370, 1.0
    %v372 = vrcp.pop %v371
    %v373 = vmul.f32 %v371, %v372
    %v374 = vsub.f32 1.0, %v373
    %v375 = vmul.f32 %v372, %v374
    %v376 = vadd.f32 %v372, %v375
    %vm377 = vweird.f32 %v371
    %vm378 = vweird.f32 %v372
    %vm379 = vmor %vm377, %vm378
    %v380 = vsel %vm379, %v372, %v376
    %v381 = vand.u32 2147483647, %v371
    %vm382 = vcmp.eq.f32.partialorder %v381, 8.507059e+37
    %v383 = vand.u32 %v371, 2147483648
    %v384 = vor.u32 1.1754944e-38, %v383
    %v385 = vsel %vm382, %v384, %v380
    %v386 = vmul.f32 1.0, %v385
    %v387 = vtanh.pop %v330
    %v388 = vmul.f32 %v386, %v255
    %390 = vrot.lane.b32.xlu0 %v387, 64
    %v391 = vpop.permute.xlu0 %390
    %v393 = vmul.f32 %v386, %v391
    %395 = vrot.lane.b32.xlu0 %v393, 32
    %v396 = vpop.permute.xlu0 %395
    %v398 = vadd.f32 %v388, %v396
    %v399 = vtanh.pop %v398
    %401 = vrot.lane.b32.xlu0 %v399, 64
    %v402 = vpop.permute.xlu0 %401
    %v404 = vmul.f32 %v386, %v402
    %406 = vrot.lane.b32.xlu0 %v367, 32
    %v407 = vpop.permute.xlu0 %406
    %v408 = vsel %vm94, %v407, 0
    %410 = vmatpush.msra.mxu0 0.0
    %411 = vmatpush.msra.mxu0 0.0
    %412 = vmatpush.msra.mxu0 0.0
    %413 = vmatpush.msra.mxu0 0.0
    %414 = vmatpush.msra.mxu0 0.0
    %415 = vmatpush.msra.mxu0 0.0
    %416 = vmatpush.msra.mxu0 0.0
    %417 = vmatpush.msra.mxu0 0.0
    %418 = vmatpush.msra.mxu0 0.0
    %419 = vmatpush.msra.mxu0 0.0
    %420 = vmatpush.msra.mxu0 0.0
    %421 = vmatpush.msra.mxu0 0.0
    %422 = vmatpush.msra.mxu0 %v80
    %423 = vmatpush.msra.mxu0 %v78
    %424 = vmatpush.msra.mxu0 %v76
    %425 = vmatpush.msra.mxu0 %v74
    %426 = vmatmul.f32.gmra.mxu0 %v408
    %v427 = vpop.f32.mrf.mxu0
    %v428 = vadd.f32 0.0, %v427
    %429 = vdwg.mxu0
    %430 = vmatpush.msra.mxu0 0.0
    %431 = vmatpush.msra.mxu0 0.0
    %432 = vmatpush.msra.mxu0 0.0
    %433 = vmatpush.msra.mxu0 0.0
    %434 = vmatpush.msra.mxu0 0.0
    %435 = vmatpush.msra.mxu0 0.0
    %436 = vmatpush.msra.mxu0 0.0
    %437 = vmatpush.msra.mxu0 0.0
    %438 = vmatpush.msra.mxu0 0.0
    %439 = vmatpush.msra.mxu0 0.0
    %440 = vmatpush.msra.mxu0 0.0
    %441 = vmatpush.msra.mxu0 0.0
    %442 = vmatpush.msra.mxu0 %v81
    %443 = vmatpush.msra.mxu0 %v79
    %444 = vmatpush.msra.mxu0 %v77
    %445 = vmatpush.msra.mxu0 %v75
    %446 = vmatmul.f32.gmra.mxu0 %v408
    %v447 = vpop.f32.mrf.mxu0
    %v448 = vadd.f32 0.0, %v447
    %449 = vdwg.mxu0
    %451 = vrot.lane.b32.xlu0 %v404, 32
    %v452 = vpop.permute.xlu0 %451
    %v453 = vsel %vm94, %v452, 0
    %455 = vmatpush.msra.mxu0 0.0
    %456 = vmatpush.msra.mxu0 0.0
    %457 = vmatpush.msra.mxu0 0.0
    %458 = vmatpush.msra.mxu0 0.0
    %459 = vmatpush.msra.mxu0 0.0
    %460 = vmatpush.msra.mxu0 0.0
    %461 = vmatpush.msra.mxu0 0.0
    %462 = vmatpush.msra.mxu0 0.0
    %463 = vmatpush.msra.mxu0 0.0
    %464 = vmatpush.msra.mxu0 0.0
    %465 = vmatpush.msra.mxu0 0.0
    %466 = vmatpush.msra.mxu0 0.0
    %467 = vmatpush.msra.mxu0 %v85
    %468 = vmatpush.msra.mxu0 %v84
    %469 = vmatpush.msra.mxu0 %v83
    %470 = vmatpush.msra.mxu0 %v82
    %471 = vmatmul.f32.gmra.mxu0 %v453
    %v472 = vpop.f32.mrf.mxu0
    %v473 = vadd.f32 0.0, %v472
    %474 = vdwg.mxu0
    %s475 = scalar_lea.vmem [#allocation6], 8
    %v476 = vld [vmem:[%s475] sm:$0xf]
    %v477 = vadd.f32 %v476, %v428
    %v478 = vadd.f32 %v448, %v473
    %v479 = vadd.f32 %v478, %v88
    %v480 = vxor.u32 %v477, 2147483648
    %v481 = vmul.f32 %v480, 1.442695
    %v482 = vpow.pop %v481
    %v483 = vadd.f32 %v482, 1.0
    %v484 = vrcp.pop %v483
    %v485 = vmul.f32 %v483, %v484
    %v486 = vsub.f32 1.0, %v485
    %v487 = vmul.f32 %v484, %v486
    %v488 = vadd.f32 %v484, %v487
    %vm489 = vweird.f32 %v483
    %vm490 = vweird.f32 %v484
    %vm491 = vmor %vm489, %vm490
    %v492 = vsel %vm491, %v484, %v488
    %v493 = vand.u32 2147483647, %v483
    %vm494 = vcmp.eq.f32.partialorder %v493, 8.507059e+37
    %v495 = vand.u32 %v483, 2147483648
    %v496 = vor.u32 1.1754944e-38, %v495
    %v497 = vsel %vm494, %v496, %v492
    %v498 = vmul.f32 1.0, %v497
    %v499 = vtanh.pop %v477
    %v500 = vmul.f32 %v498, %v361
    %502 = vrot.lane.b32.xlu0 %v499, 64
    %v503 = vpop.permute.xlu0 %502
    %v505 = vmul.f32 %v498, %v503
    %507 = vrot.lane.b32.xlu0 %v505, 32
    %v508 = vpop.permute.xlu0 %507
    %v510 = vadd.f32 %v500, %v508
    %v511 = vtanh.pop %v510
    %513 = vrot.lane.b32.xlu0 %v511, 64
    %v514 = vpop.permute.xlu0 %513
    %v516 = vmul.f32 %v498, %v514
    %v517 = vxor.u32 %v479, 2147483648
    %v518 = vmul.f32 %v517, 1.442695
    %v519 = vpow.pop %v518
    %v520 = vadd.f32 %v519, 1.0
    %v521 = vrcp.pop %v520
    %v522 = vmul.f32 %v520, %v521
    %v523 = vsub.f32 1.0, %v522
    %v524 = vmul.f32 %v521, %v523
    %v525 = vadd.f32 %v521, %v524
    %vm526 = vweird.f32 %v520
    %vm527 = vweird.f32 %v521
    %vm528 = vmor %vm526, %vm527
    %v529 = vsel %vm528, %v521, %v525
    %v530 = vand.u32 2147483647, %v520
    %vm531 = vcmp.eq.f32.partialorder %v530, 8.507059e+37
    %v532 = vand.u32 %v520, 2147483648
    %v533 = vor.u32 1.1754944e-38, %v532
    %v534 = vsel %vm531, %v533, %v529
    %v535 = vmul.f32 1.0, %v534
    %v536 = vtanh.pop %v479
    %v537 = vmul.f32 %v535, %v398
    %539 = vrot.lane.b32.xlu0 %v536, 64
    %v540 = vpop.permute.xlu0 %539
    %v542 = vmul.f32 %v535, %v540
    %544 = vrot.lane.b32.xlu0 %v542, 32
    %v545 = vpop.permute.xlu0 %544
    %v547 = vadd.f32 %v537, %v545
    %v548 = vtanh.pop %v547
    %550 = vrot.lane.b32.xlu0 %v548, 64
    %v551 = vpop.permute.xlu0 %550
    %v553 = vmul.f32 %v535, %v551
    %555 = vrot.lane.b32.xlu0 %v516, 32
    %v556 = vpop.permute.xlu0 %555
    %v557 = vsel %vm94, %v556, 0
    %559 = vmatpush.msra.mxu0 0.0
    %560 = vmatpush.msra.mxu0 0.0
    %561 = vmatpush.msra.mxu0 0.0
    %562 = vmatpush.msra.mxu0 0.0
    %563 = vmatpush.msra.mxu0 0.0
    %564 = vmatpush.msra.mxu0 0.0
    %565 = vmatpush.msra.mxu0 0.0
    %566 = vmatpush.msra.mxu0 0.0
    %567 = vmatpush.msra.mxu0 0.0
    %568 = vmatpush.msra.mxu0 0.0
    %569 = vmatpush.msra.mxu0 0.0
    %570 = vmatpush.msra.mxu0 0.0
    %571 = vmatpush.msra.mxu0 %v80
    %572 = vmatpush.msra.mxu0 %v78
    %573 = vmatpush.msra.mxu0 %v76
    %574 = vmatpush.msra.mxu0 %v74
    %575 = vmatmul.f32.gmra.mxu0 %v557
    %v576 = vpop.f32.mrf.mxu0
    %v577 = vadd.f32 0.0, %v576
    %578 = vdwg.mxu0
    %579 = vmatpush.msra.mxu0 0.0
    %580 = vmatpush.msra.mxu0 0.0
    %581 = vmatpush.msra.mxu0 0.0
    %582 = vmatpush.msra.mxu0 0.0
    %583 = vmatpush.msra.mxu0 0.0
    %584 = vmatpush.msra.mxu0 0.0
    %585 = vmatpush.msra.mxu0 0.0
    %586 = vmatpush.msra.mxu0 0.0
    %587 = vmatpush.msra.mxu0 0.0
    %588 = vmatpush.msra.mxu0 0.0
    %589 = vmatpush.msra.mxu0 0.0
    %590 = vmatpush.msra.mxu0 0.0
    %591 = vmatpush.msra.mxu0 %v81
    %592 = vmatpush.msra.mxu0 %v79
    %593 = vmatpush.msra.mxu0 %v77
    %594 = vmatpush.msra.mxu0 %v75
    %595 = vmatmul.f32.gmra.mxu0 %v557
    %v596 = vpop.f32.mrf.mxu0
    %v597 = vadd.f32 0.0, %v596
    %598 = vdwg.mxu0
    %600 = vrot.lane.b32.xlu0 %v553, 32
    %v601 = vpop.permute.xlu0 %600
    %v602 = vsel %vm94, %v601, 0
    %604 = vmatpush.msra.mxu0 0.0
    %605 = vmatpush.msra.mxu0 0.0
    %606 = vmatpush.msra.mxu0 0.0
    %607 = vmatpush.msra.mxu0 0.0
    %608 = vmatpush.msra.mxu0 0.0
    %609 = vmatpush.msra.mxu0 0.0
    %610 = vmatpush.msra.mxu0 0.0
    %611 = vmatpush.msra.mxu0 0.0
    %612 = vmatpush.msra.mxu0 0.0
    %613 = vmatpush.msra.mxu0 0.0
    %614 = vmatpush.msra.mxu0 0.0
    %615 = vmatpush.msra.mxu0 0.0
    %616 = vmatpush.msra.mxu0 %v85
    %617 = vmatpush.msra.mxu0 %v84
    %618 = vmatpush.msra.mxu0 %v83
    %619 = vmatpush.msra.mxu0 %v82
    %620 = vmatmul.f32.gmra.mxu0 %v602
    %v621 = vpop.f32.mrf.mxu0
    %v622 = vadd.f32 0.0, %v621
    %623 = vdwg.mxu0
    %s624 = scalar_lea.vmem [#allocation6], 12
    %v625 = vld [vmem:[%s624] sm:$0xf]
    %v626 = vadd.f32 %v625, %v577
    %v627 = vadd.f32 %v597, %v622
    %v628 = vadd.f32 %v627, %v88
    %v629 = vxor.u32 %v626, 2147483648
    %v630 = vmul.f32 %v629, 1.442695
    %v631 = vpow.pop %v630
    %v632 = vadd.f32 %v631, 1.0
    %v633 = vrcp.pop %v632
    %v634 = vmul.f32 %v632, %v633
    %v635 = vsub.f32 1.0, %v634
    %v636 = vmul.f32 %v633, %v635
    %v637 = vadd.f32 %v633, %v636
    %vm638 = vweird.f32 %v632
    %vm639 = vweird.f32 %v633
    %vm640 = vmor %vm638, %vm639
    %v641 = vsel %vm640, %v633, %v637
    %v642 = vand.u32 2147483647, %v632
    %vm643 = vcmp.eq.f32.partialorder %v642, 8.507059e+37
    %v644 = vand.u32 %v632, 2147483648
    %v645 = vor.u32 1.1754944e-38, %v644
    %v646 = vsel %vm643, %v645, %v641
    %v647 = vmul.f32 1.0, %v646
    %v648 = vtanh.pop %v626
    %v649 = vmul.f32 %v647, %v510
    %651 = vrot.lane.b32.xlu0 %v648, 64
    %v652 = vpop.permute.xlu0 %651
    %v654 = vmul.f32 %v647, %v652
    %656 = vrot.lane.b32.xlu0 %v654, 32
    %v657 = vpop.permute.xlu0 %656
    %v659 = vadd.f32 %v649, %v657
    %v660 = vtanh.pop %v659
    %662 = vrot.lane.b32.xlu0 %v660, 64
    %v663 = vpop.permute.xlu0 %662
    %v665 = vmul.f32 %v647, %v663
    %v666 = vxor.u32 %v628, 2147483648
    %v667 = vmul.f32 %v666, 1.442695
    %v668 = vpow.pop %v667
    %v669 = vadd.f32 %v668, 1.0
    %v670 = vrcp.pop %v669
    %v671 = vmul.f32 %v669, %v670
    %v672 = vsub.f32 1.0, %v671
    %v673 = vmul.f32 %v670, %v672
    %v674 = vadd.f32 %v670, %v673
    %vm675 = vweird.f32 %v669
    %vm676 = vweird.f32 %v670
    %vm677 = vmor %vm675, %vm676
    %v678 = vsel %vm677, %v670, %v674
    %v679 = vand.u32 2147483647, %v669
    %vm680 = vcmp.eq.f32.partialorder %v679, 8.507059e+37
    %v681 = vand.u32 %v669, 2147483648
    %v682 = vor.u32 1.1754944e-38, %v681
    %v683 = vsel %vm680, %v682, %v678
    %v684 = vmul.f32 1.0, %v683
    %v685 = vtanh.pop %v628
    %v686 = vmul.f32 %v684, %v547
    %688 = vrot.lane.b32.xlu0 %v685, 64
    %v689 = vpop.permute.xlu0 %688
    %v691 = vmul.f32 %v684, %v689
    %693 = vrot.lane.b32.xlu0 %v691, 32
    %v694 = vpop.permute.xlu0 %693
    %v696 = vadd.f32 %v686, %v694
    %v697 = vtanh.pop %v696
    %699 = vrot.lane.b32.xlu0 %v697, 64
    %v700 = vpop.permute.xlu0 %699
    %v702 = vmul.f32 %v684, %v700
    %704 = vrot.lane.b32.xlu0 %v665, 32
    %v705 = vpop.permute.xlu0 %704
    %v706 = vsel %vm94, %v705, 0
    %708 = vmatpush.msra.mxu0 0.0
    %709 = vmatpush.msra.mxu0 0.0
    %710 = vmatpush.msra.mxu0 0.0
    %711 = vmatpush.msra.mxu0 0.0
    %712 = vmatpush.msra.mxu0 0.0
    %713 = vmatpush.msra.mxu0 0.0
    %714 = vmatpush.msra.mxu0 0.0
    %715 = vmatpush.msra.mxu0 0.0
    %716 = vmatpush.msra.mxu0 0.0
    %717 = vmatpush.msra.mxu0 0.0
    %718 = vmatpush.msra.mxu0 0.0
    %719 = vmatpush.msra.mxu0 0.0
    %720 = vmatpush.msra.mxu0 %v80
    %721 = vmatpush.msra.mxu0 %v78
    %722 = vmatpush.msra.mxu0 %v76
    %723 = vmatpush.msra.mxu0 %v74
    %724 = vmatmul.f32.gmra.mxu0 %v706
    %v725 = vpop.f32.mrf.mxu0
    %v726 = vadd.f32 0.0, %v725
    %727 = vdwg.mxu0
    %728 = vmatpush.msra.mxu0 0.0
    %729 = vmatpush.msra.mxu0 0.0
    %730 = vmatpush.msra.mxu0 0.0
    %731 = vmatpush.msra.mxu0 0.0
    %732 = vmatpush.msra.mxu0 0.0
    %733 = vmatpush.msra.mxu0 0.0
    %734 = vmatpush.msra.mxu0 0.0
    %735 = vmatpush.msra.mxu0 0.0
    %736 = vmatpush.msra.mxu0 0.0
    %737 = vmatpush.msra.mxu0 0.0
    %738 = vmatpush.msra.mxu0 0.0
    %739 = vmatpush.msra.mxu0 0.0
    %740 = vmatpush.msra.mxu0 %v81
    %741 = vmatpush.msra.mxu0 %v79
    %742 = vmatpush.msra.mxu0 %v77
    %743 = vmatpush.msra.mxu0 %v75
    %744 = vmatmul.f32.gmra.mxu0 %v706
    %v745 = vpop.f32.mrf.mxu0
    %v746 = vadd.f32 0.0, %v745
    %747 = vdwg.mxu0
    %749 = vrot.lane.b32.xlu0 %v702, 32
    %v750 = vpop.permute.xlu0 %749
    %v751 = vsel %vm94, %v750, 0
    %753 = vmatpush.msra.mxu0 0.0
    %754 = vmatpush.msra.mxu0 0.0
    %755 = vmatpush.msra.mxu0 0.0
    %756 = vmatpush.msra.mxu0 0.0
    %757 = vmatpush.msra.mxu0 0.0
    %758 = vmatpush.msra.mxu0 0.0
    %759 = vmatpush.msra.mxu0 0.0
    %760 = vmatpush.msra.mxu0 0.0
    %761 = vmatpush.msra.mxu0 0.0
    %762 = vmatpush.msra.mxu0 0.0
    %763 = vmatpush.msra.mxu0 0.0
    %764 = vmatpush.msra.mxu0 0.0
    %765 = vmatpush.msra.mxu0 %v85
    %766 = vmatpush.msra.mxu0 %v84
    %767 = vmatpush.msra.mxu0 %v83
    %768 = vmatpush.msra.mxu0 %v82
    %769 = vmatmul.f32.gmra.mxu0 %v751
    %v770 = vpop.f32.mrf.mxu0
    %v771 = vadd.f32 0.0, %v770
    %772 = vdwg.mxu0
    %s773 = scalar_lea.vmem [#allocation6], 16
    %v774 = vld [vmem:[%s773] sm:$0xf]
    %v775 = vadd.f32 %v774, %v726
    %v776 = vadd.f32 %v746, %v771
    %v777 = vadd.f32 %v776, %v88
    %v778 = vxor.u32 %v775, 2147483648
    %v779 = vmul.f32 %v778, 1.442695
    %v780 = vpow.pop %v779
    %v781 = vadd.f32 %v780, 1.0
    %v782 = vrcp.pop %v781
    %v783 = vmul.f32 %v781, %v782
    %v784 = vsub.f32 1.0, %v783
    %v785 = vmul.f32 %v782, %v784
    %v786 = vadd.f32 %v782, %v785
    %vm787 = vweird.f32 %v781
    %vm788 = vweird.f32 %v782
    %vm789 = vmor %vm787, %vm788
    %v790 = vsel %vm789, %v782, %v786
    %v791 = vand.u32 2147483647, %v781
    %vm792 = vcmp.eq.f32.partialorder %v791, 8.507059e+37
    %v793 = vand.u32 %v781, 2147483648
    %v794 = vor.u32 1.1754944e-38, %v793
    %v795 = vsel %vm792, %v794, %v790
    %v796 = vmul.f32 1.0, %v795
    %v797 = vtanh.pop %v775
    %v798 = vmul.f32 %v796, %v659
    %800 = vrot.lane.b32.xlu0 %v797, 64
    %v801 = vpop.permute.xlu0 %800
    %v803 = vmul.f32 %v796, %v801
    %805 = vrot.lane.b32.xlu0 %v803, 32
    %v806 = vpop.permute.xlu0 %805
    %v808 = vadd.f32 %v798, %v806
    %v809 = vtanh.pop %v808
    %811 = vrot.lane.b32.xlu0 %v809, 64
    %v812 = vpop.permute.xlu0 %811
    %v814 = vmul.f32 %v796, %v812
    %v815 = vxor.u32 %v777, 2147483648
    %v816 = vmul.f32 %v815, 1.442695
    %v817 = vpow.pop %v816
    %v818 = vadd.f32 %v817, 1.0
    %v819 = vrcp.pop %v818
    %v820 = vmul.f32 %v818, %v819
    %v821 = vsub.f32 1.0, %v820
    %v822 = vmul.f32 %v819, %v821
    %v823 = vadd.f32 %v819, %v822
    %vm824 = vweird.f32 %v818
    %vm825 = vweird.f32 %v819
    %vm826 = vmor %vm824, %vm825
    %v827 = vsel %vm826, %v819, %v823
    %v828 = vand.u32 2147483647, %v818
    %vm829 = vcmp.eq.f32.partialorder %v828, 8.507059e+37
    %v830 = vand.u32 %v818, 2147483648
    %v831 = vor.u32 1.1754944e-38, %v830
    %v832 = vsel %vm829, %v831, %v827
    %v833 = vmul.f32 1.0, %v832
    %v834 = vtanh.pop %v777
    %v835 = vmul.f32 %v833, %v696
    %837 = vrot.lane.b32.xlu0 %v834, 64
    %v838 = vpop.permute.xlu0 %837
    %v840 = vmul.f32 %v833, %v838
    %842 = vrot.lane.b32.xlu0 %v840, 32
    %v843 = vpop.permute.xlu0 %842
    %v845 = vadd.f32 %v835, %v843
    %v846 = vtanh.pop %v845
    %848 = vrot.lane.b32.xlu0 %v846, 64
    %v849 = vpop.permute.xlu0 %848
    %v851 = vmul.f32 %v833, %v849
    %853 = vrot.lane.b32.xlu0 %v814, 32
    %v854 = vpop.permute.xlu0 %853
    %v855 = vsel %vm94, %v854, 0
    %857 = vmatpush.msra.mxu0 0.0
    %858 = vmatpush.msra.mxu0 0.0
    %859 = vmatpush.msra.mxu0 0.0
    %860 = vmatpush.msra.mxu0 0.0
    %861 = vmatpush.msra.mxu0 0.0
    %862 = vmatpush.msra.mxu0 0.0
    %863 = vmatpush.msra.mxu0 0.0
    %864 = vmatpush.msra.mxu0 0.0
    %865 = vmatpush.msra.mxu0 0.0
    %866 = vmatpush.msra.mxu0 0.0
    %867 = vmatpush.msra.mxu0 0.0
    %868 = vmatpush.msra.mxu0 0.0
    %869 = vmatpush.msra.mxu0 %v80
    %870 = vmatpush.msra.mxu0 %v78
    %871 = vmatpush.msra.mxu0 %v76
    %872 = vmatpush.msra.mxu0 %v74
    %873 = vmatmul.f32.gmra.mxu0 %v855
    %v874 = vpop.f32.mrf.mxu0
    %v875 = vadd.f32 0.0, %v874
    %876 = vdwg.mxu0
    %877 = vmatpush.msra.mxu0 0.0
    %878 = vmatpush.msra.mxu0 0.0
    %879 = vmatpush.msra.mxu0 0.0
    %880 = vmatpush.msra.mxu0 0.0
    %881 = vmatpush.msra.mxu0 0.0
    %882 = vmatpush.msra.mxu0 0.0
    %883 = vmatpush.msra.mxu0 0.0
    %884 = vmatpush.msra.mxu0 0.0
    %885 = vmatpush.msra.mxu0 0.0
    %886 = vmatpush.msra.mxu0 0.0
    %887 = vmatpush.msra.mxu0 0.0
    %888 = vmatpush.msra.mxu0 0.0
    %889 = vmatpush.msra.mxu0 %v81
    %890 = vmatpush.msra.mxu0 %v79
    %891 = vmatpush.msra.mxu0 %v77
    %892 = vmatpush.msra.mxu0 %v75
    %893 = vmatmul.f32.gmra.mxu0 %v855
    %v894 = vpop.f32.mrf.mxu0
    %v895 = vadd.f32 0.0, %v894
    %896 = vdwg.mxu0
    %898 = vrot.lane.b32.xlu0 %v851, 32
    %v899 = vpop.permute.xlu0 %898
    %v900 = vsel %vm94, %v899, 0
    %902 = vmatpush.msra.mxu0 0.0
    %903 = vmatpush.msra.mxu0 0.0
    %904 = vmatpush.msra.mxu0 0.0
    %905 = vmatpush.msra.mxu0 0.0
    %906 = vmatpush.msra.mxu0 0.0
    %907 = vmatpush.msra.mxu0 0.0
    %908 = vmatpush.msra.mxu0 0.0
    %909 = vmatpush.msra.mxu0 0.0
    %910 = vmatpush.msra.mxu0 0.0
    %911 = vmatpush.msra.mxu0 0.0
    %912 = vmatpush.msra.mxu0 0.0
    %913 = vmatpush.msra.mxu0 0.0
    %914 = vmatpush.msra.mxu0 %v85
    %915 = vmatpush.msra.mxu0 %v84
    %916 = vmatpush.msra.mxu0 %v83
    %917 = vmatpush.msra.mxu0 %v82
    %918 = vmatmul.f32.gmra.mxu0 %v900
    %v919 = vpop.f32.mrf.mxu0
    %v920 = vadd.f32 0.0, %v919
    %921 = vdwg.mxu0
    %s922 = scalar_lea.vmem [#allocation6], 20
    %v923 = vld [vmem:[%s922] sm:$0xf]
    %v924 = vadd.f32 %v923, %v875
    %v925 = vadd.f32 %v895, %v920
    %v926 = vadd.f32 %v925, %v88
    %v927 = vxor.u32 %v924, 2147483648
    %v928 = vmul.f32 %v927, 1.442695
    %v929 = vpow.pop %v928
    %v930 = vadd.f32 %v929, 1.0
    %v931 = vrcp.pop %v930
    %v932 = vmul.f32 %v930, %v931
    %v933 = vsub.f32 1.0, %v932
    %v934 = vmul.f32 %v931, %v933
    %v935 = vadd.f32 %v931, %v934
    %vm936 = vweird.f32 %v930
    %vm937 = vweird.f32 %v931
    %vm938 = vmor %vm936, %vm937
    %v939 = vsel %vm938, %v931, %v935
    %v940 = vand.u32 2147483647, %v930
    %vm941 = vcmp.eq.f32.partialorder %v940, 8.507059e+37
    %v942 = vand.u32 %v930, 2147483648
    %v943 = vor.u32 1.1754944e-38, %v942
    %v944 = vsel %vm941, %v943, %v939
    %v945 = vmul.f32 1.0, %v944
    %v946 = vtanh.pop %v924
    %v947 = vmul.f32 %v945, %v808
    %949 = vrot.lane.b32.xlu0 %v946, 64
    %v950 = vpop.permute.xlu0 %949
    %v952 = vmul.f32 %v945, %v950
    %954 = vrot.lane.b32.xlu0 %v952, 32
    %v955 = vpop.permute.xlu0 %954
    %v957 = vadd.f32 %v947, %v955
    %v958 = vtanh.pop %v957
    %960 = vrot.lane.b32.xlu0 %v958, 64
    %v961 = vpop.permute.xlu0 %960
    %v963 = vmul.f32 %v945, %v961
    %v964 = vxor.u32 %v926, 2147483648
    %v965 = vmul.f32 %v964, 1.442695
    %v966 = vpow.pop %v965
    %v967 = vadd.f32 %v966, 1.0
    %v968 = vrcp.pop %v967
    %v969 = vmul.f32 %v967, %v968
    %v970 = vsub.f32 1.0, %v969
    %v971 = vmul.f32 %v968, %v970
    %v972 = vadd.f32 %v968, %v971
    %vm973 = vweird.f32 %v967
    %vm974 = vweird.f32 %v968
    %vm975 = vmor %vm973, %vm974
    %v976 = vsel %vm975, %v968, %v972
    %v977 = vand.u32 2147483647, %v967
    %vm978 = vcmp.eq.f32.partialorder %v977, 8.507059e+37
    %v979 = vand.u32 %v967, 2147483648
    %v980 = vor.u32 1.1754944e-38, %v979
    %v981 = vsel %vm978, %v980, %v976
    %v982 = vmul.f32 1.0, %v981
    %v983 = vtanh.pop %v926
    %v984 = vmul.f32 %v982, %v845
    %986 = vrot.lane.b32.xlu0 %v983, 64
    %v987 = vpop.permute.xlu0 %986
    %v989 = vmul.f32 %v982, %v987
    %991 = vrot.lane.b32.xlu0 %v989, 32
    %v992 = vpop.permute.xlu0 %991
    %v994 = vadd.f32 %v984, %v992
    %v995 = vtanh.pop %v994
    %997 = vrot.lane.b32.xlu0 %v995, 64
    %v998 = vpop.permute.xlu0 %997
    %v1000 = vmul.f32 %v982, %v998
    %1002 = vrot.lane.b32.xlu0 %v963, 32
    %v1003 = vpop.permute.xlu0 %1002
    %v1004 = vsel %vm94, %v1003, 0
    %1006 = vmatpush.msra.mxu0 0.0
    %1007 = vmatpush.msra.mxu0 0.0
    %1008 = vmatpush.msra.mxu0 0.0
    %1009 = vmatpush.msra.mxu0 0.0
    %1010 = vmatpush.msra.mxu0 0.0
    %1011 = vmatpush.msra.mxu0 0.0
    %1012 = vmatpush.msra.mxu0 0.0
    %1013 = vmatpush.msra.mxu0 0.0
    %1014 = vmatpush.msra.mxu0 0.0
    %1015 = vmatpush.msra.mxu0 0.0
    %1016 = vmatpush.msra.mxu0 0.0
    %1017 = vmatpush.msra.mxu0 0.0
    %1018 = vmatpush.msra.mxu0 %v80
    %1019 = vmatpush.msra.mxu0 %v78
    %1020 = vmatpush.msra.mxu0 %v76
    %1021 = vmatpush.msra.mxu0 %v74
    %1022 = vmatmul.f32.gmra.mxu0 %v1004
    %v1023 = vpop.f32.mrf.mxu0
    %v1024 = vadd.f32 0.0, %v1023
    %1025 = vdwg.mxu0
    %1026 = vmatpush.msra.mxu0 0.0
    %1027 = vmatpush.msra.mxu0 0.0
    %1028 = vmatpush.msra.mxu0 0.0
    %1029 = vmatpush.msra.mxu0 0.0
    %1030 = vmatpush.msra.mxu0 0.0
    %1031 = vmatpush.msra.mxu0 0.0
    %1032 = vmatpush.msra.mxu0 0.0
    %1033 = vmatpush.msra.mxu0 0.0
    %1034 = vmatpush.msra.mxu0 0.0
    %1035 = vmatpush.msra.mxu0 0.0
    %1036 = vmatpush.msra.mxu0 0.0
    %1037 = vmatpush.msra.mxu0 0.0
    %1038 = vmatpush.msra.mxu0 %v81
    %1039 = vmatpush.msra.mxu0 %v79
    %1040 = vmatpush.msra.mxu0 %v77
    %1041 = vmatpush.msra.mxu0 %v75
    %1042 = vmatmul.f32.gmra.mxu0 %v1004
    %v1043 = vpop.f32.mrf.mxu0
    %v1044 = vadd.f32 0.0, %v1043
    %1045 = vdwg.mxu0
    %1047 = vrot.lane.b32.xlu0 %v1000, 32
    %v1048 = vpop.permute.xlu0 %1047
    %v1049 = vsel %vm94, %v1048, 0
    %1051 = vmatpush.msra.mxu0 0.0
    %1052 = vmatpush.msra.mxu0 0.0
    %1053 = vmatpush.msra.mxu0 0.0
    %1054 = vmatpush.msra.mxu0 0.0
    %1055 = vmatpush.msra.mxu0 0.0
    %1056 = vmatpush.msra.mxu0 0.0
    %1057 = vmatpush.msra.mxu0 0.0
    %1058 = vmatpush.msra.mxu0 0.0
    %1059 = vmatpush.msra.mxu0 0.0
    %1060 = vmatpush.msra.mxu0 0.0
    %1061 = vmatpush.msra.mxu0 0.0
    %1062 = vmatpush.msra.mxu0 0.0
    %1063 = vmatpush.msra.mxu0 %v85
    %1064 = vmatpush.msra.mxu0 %v84
    %1065 = vmatpush.msra.mxu0 %v83
    %1066 = vmatpush.msra.mxu0 %v82
    %1067 = vmatmul.f32.gmra.mxu0 %v1049
    %v1068 = vpop.f32.mrf.mxu0
    %v1069 = vadd.f32 0.0, %v1068
    %1070 = vdwg.mxu0
    %s1071 = scalar_lea.vmem [#allocation6], 24
    %v1072 = vld [vmem:[%s1071] sm:$0xf]
    %v1073 = vadd.f32 %v1072, %v1024
    %v1074 = vadd.f32 %v1044, %v1069
    %v1075 = vadd.f32 %v1074, %v88
    %v1076 = vxor.u32 %v1073, 2147483648
    %v1077 = vmul.f32 %v1076, 1.442695
    %v1078 = vpow.pop %v1077
    %v1079 = vadd.f32 %v1078, 1.0
    %v1080 = vrcp.pop %v1079
    %v1081 = vmul.f32 %v1079, %v1080
    %v1082 = vsub.f32 1.0, %v1081
    %v1083 = vmul.f32 %v1080, %v1082
    %v1084 = vadd.f32 %v1080, %v1083
    %vm1085 = vweird.f32 %v1079
    %vm1086 = vweird.f32 %v1080
    %vm1087 = vmor %vm1085, %vm1086
    %v1088 = vsel %vm1087, %v1080, %v1084
    %v1089 = vand.u32 2147483647, %v1079
    %vm1090 = vcmp.eq.f32.partialorder %v1089, 8.507059e+37
    %v1091 = vand.u32 %v1079, 2147483648
    %v1092 = vor.u32 1.1754944e-38, %v1091
    %v1093 = vsel %vm1090, %v1092, %v1088
    %v1094 = vmul.f32 1.0, %v1093
    %v1095 = vtanh.pop %v1073
    %v1096 = vmul.f32 %v1094, %v957
    %1098 = vrot.lane.b32.xlu0 %v1095, 64
    %v1099 = vpop.permute.xlu0 %1098
    %v1101 = vmul.f32 %v1094, %v1099
    %1103 = vrot.lane.b32.xlu0 %v1101, 32
    %v1104 = vpop.permute.xlu0 %1103
    %v1106 = vadd.f32 %v1096, %v1104
    %v1107 = vtanh.pop %v1106
    %1109 = vrot.lane.b32.xlu0 %v1107, 64
    %v1110 = vpop.permute.xlu0 %1109
    %v1112 = vmul.f32 %v1094, %v1110
    %v1113 = vxor.u32 %v1075, 2147483648
    %v1114 = vmul.f32 %v1113, 1.442695
    %v1115 = vpow.pop %v1114
    %v1116 = vadd.f32 %v1115, 1.0
    %v1117 = vrcp.pop %v1116
    %v1118 = vmul.f32 %v1116, %v1117
    %v1119 = vsub.f32 1.0, %v1118
    %v1120 = vmul.f32 %v1117, %v1119
    %v1121 = vadd.f32 %v1117, %v1120
    %vm1122 = vweird.f32 %v1116
    %vm1123 = vweird.f32 %v1117
    %vm1124 = vmor %vm1122, %vm1123
    %v1125 = vsel %vm1124, %v1117, %v1121
    %v1126 = vand.u32 2147483647, %v1116
    %vm1127 = vcmp.eq.f32.partialorder %v1126, 8.507059e+37
    %v1128 = vand.u32 %v1116, 2147483648
    %v1129 = vor.u32 1.1754944e-38, %v1128
    %v1130 = vsel %vm1127, %v1129, %v1125
    %v1131 = vmul.f32 1.0, %v1130
    %v1132 = vtanh.pop %v1075
    %v1133 = vmul.f32 %v1131, %v994
    %1135 = vrot.lane.b32.xlu0 %v1132, 64
    %v1136 = vpop.permute.xlu0 %1135
    %v1138 = vmul.f32 %v1131, %v1136
    %1140 = vrot.lane.b32.xlu0 %v1138, 32
    %v1141 = vpop.permute.xlu0 %1140
    %v1143 = vadd.f32 %v1133, %v1141
    %v1144 = vtanh.pop %v1143
    %1146 = vrot.lane.b32.xlu0 %v1144, 64
    %v1147 = vpop.permute.xlu0 %1146
    %v1149 = vmul.f32 %v1131, %v1147
    %1151 = vrot.lane.b32.xlu0 %v1112, 32
    %v1152 = vpop.permute.xlu0 %1151
    %v1153 = vsel %vm94, %v1152, 0
    %1155 = vmatpush.msra.mxu0 0.0
    %1156 = vmatpush.msra.mxu0 0.0
    %1157 = vmatpush.msra.mxu0 0.0
    %1158 = vmatpush.msra.mxu0 0.0
    %1159 = vmatpush.msra.mxu0 0.0
    %1160 = vmatpush.msra.mxu0 0.0
    %1161 = vmatpush.msra.mxu0 0.0
    %1162 = vmatpush.msra.mxu0 0.0
    %1163 = vmatpush.msra.mxu0 0.0
    %1164 = vmatpush.msra.mxu0 0.0
    %1165 = vmatpush.msra.mxu0 0.0
    %1166 = vmatpush.msra.mxu0 0.0
    %1167 = vmatpush.msra.mxu0 %v80
    %1168 = vmatpush.msra.mxu0 %v78
    %1169 = vmatpush.msra.mxu0 %v76
    %1170 = vmatpush.msra.mxu0 %v74
    %1171 = vmatmul.f32.gmra.mxu0 %v1153
    %v1172 = vpop.f32.mrf.mxu0
    %v1173 = vadd.f32 0.0, %v1172
    %1174 = vdwg.mxu0
    %1175 = vmatpush.msra.mxu0 0.0
    %1176 = vmatpush.msra.mxu0 0.0
    %1177 = vmatpush.msra.mxu0 0.0
    %1178 = vmatpush.msra.mxu0 0.0
    %1179 = vmatpush.msra.mxu0 0.0
    %1180 = vmatpush.msra.mxu0 0.0
    %1181 = vmatpush.msra.mxu0 0.0
    %1182 = vmatpush.msra.mxu0 0.0
    %1183 = vmatpush.msra.mxu0 0.0
    %1184 = vmatpush.msra.mxu0 0.0
    %1185 = vmatpush.msra.mxu0 0.0
    %1186 = vmatpush.msra.mxu0 0.0
    %1187 = vmatpush.msra.mxu0 %v81
    %1188 = vmatpush.msra.mxu0 %v79
    %1189 = vmatpush.msra.mxu0 %v77
    %1190 = vmatpush.msra.mxu0 %v75
    %1191 = vmatmul.f32.gmra.mxu0 %v1153
    %v1192 = vpop.f32.mrf.mxu0
    %v1193 = vadd.f32 0.0, %v1192
    %1194 = vdwg.mxu0
    %1196 = vrot.lane.b32.xlu0 %v1149, 32
    %v1197 = vpop.permute.xlu0 %1196
    %v1198 = vsel %vm94, %v1197, 0
    %1200 = vmatpush.msra.mxu0 0.0
    %1201 = vmatpush.msra.mxu0 0.0
    %1202 = vmatpush.msra.mxu0 0.0
    %1203 = vmatpush.msra.mxu0 0.0
    %1204 = vmatpush.msra.mxu0 0.0
    %1205 = vmatpush.msra.mxu0 0.0
    %1206 = vmatpush.msra.mxu0 0.0
    %1207 = vmatpush.msra.mxu0 0.0
    %1208 = vmatpush.msra.mxu0 0.0
    %1209 = vmatpush.msra.mxu0 0.0
    %1210 = vmatpush.msra.mxu0 0.0
    %1211 = vmatpush.msra.mxu0 0.0
    %1212 = vmatpush.msra.mxu0 %v85
    %1213 = vmatpush.msra.mxu0 %v84
    %1214 = vmatpush.msra.mxu0 %v83
    %1215 = vmatpush.msra.mxu0 %v82
    %1216 = vmatmul.f32.gmra.mxu0 %v1198
    %v1217 = vpop.f32.mrf.mxu0
    %v1218 = vadd.f32 0.0, %v1217
    %1219 = vdwg.mxu0
    %s1220 = scalar_lea.vmem [#allocation6], 28
    %v1221 = vld [vmem:[%s1220] sm:$0xf]
    %v1222 = vadd.f32 %v1221, %v1173
    %v1223 = vadd.f32 %v1193, %v1218
    %v1224 = vadd.f32 %v1223, %v88
    %v1225 = vxor.u32 %v1222, 2147483648
    %v1226 = vmul.f32 %v1225, 1.442695
    %v1227 = vpow.pop %v1226
    %v1228 = vadd.f32 %v1227, 1.0
    %v1229 = vrcp.pop %v1228
    %v1230 = vmul.f32 %v1228, %v1229
    %v1231 = vsub.f32 1.0, %v1230
    %v1232 = vmul.f32 %v1229, %v1231
    %v1233 = vadd.f32 %v1229, %v1232
    %vm1234 = vweird.f32 %v1228
    %vm1235 = vweird.f32 %v1229
    %vm1236 = vmor %vm1234, %vm1235
    %v1237 = vsel %vm1236, %v1229, %v1233
    %v1238 = vand.u32 2147483647, %v1228
    %vm1239 = vcmp.eq.f32.partialorder %v1238, 8.507059e+37
    %v1240 = vand.u32 %v1228, 2147483648
    %v1241 = vor.u32 1.1754944e-38, %v1240
    %v1242 = vsel %vm1239, %v1241, %v1237
    %v1243 = vmul.f32 1.0, %v1242
    %v1244 = vtanh.pop %v1222
    %v1245 = vmul.f32 %v1243, %v1106
    %1247 = vrot.lane.b32.xlu0 %v1244, 64
    %v1248 = vpop.permute.xlu0 %1247
    %v1250 = vmul.f32 %v1243, %v1248
    %1252 = vrot.lane.b32.xlu0 %v1250, 32
    %v1253 = vpop.permute.xlu0 %1252
    %v1255 = vadd.f32 %v1245, %v1253
    %v1256 = vtanh.pop %v1255
    %1258 = vrot.lane.b32.xlu0 %v1256, 64
    %v1259 = vpop.permute.xlu0 %1258
    %v1261 = vmul.f32 %v1243, %v1259
    %v1262 = vxor.u32 %v1224, 2147483648
    %v1263 = vmul.f32 %v1262, 1.442695
    %v1264 = vpow.pop %v1263
    %v1265 = vadd.f32 %v1264, 1.0
    %v1266 = vrcp.pop %v1265
    %v1267 = vmul.f32 %v1265, %v1266
    %v1268 = vsub.f32 1.0, %v1267
    %v1269 = vmul.f32 %v1266, %v1268
    %v1270 = vadd.f32 %v1266, %v1269
    %vm1271 = vweird.f32 %v1265
    %vm1272 = vweird.f32 %v1266
    %vm1273 = vmor %vm1271, %vm1272
    %v1274 = vsel %vm1273, %v1266, %v1270
    %v1275 = vand.u32 2147483647, %v1265
    %vm1276 = vcmp.eq.f32.partialorder %v1275, 8.507059e+37
    %v1277 = vand.u32 %v1265, 2147483648
    %v1278 = vor.u32 1.1754944e-38, %v1277
    %v1279 = vsel %vm1276, %v1278, %v1274
    %v1280 = vmul.f32 1.0, %v1279
    %v1281 = vtanh.pop %v1224
    %v1282 = vmul.f32 %v1280, %v1143
    %1284 = vrot.lane.b32.xlu0 %v1281, 64
    %v1285 = vpop.permute.xlu0 %1284
    %v1287 = vmul.f32 %v1280, %v1285
    %1289 = vrot.lane.b32.xlu0 %v1287, 32
    %v1290 = vpop.permute.xlu0 %1289
    %v1292 = vadd.f32 %v1282, %v1290
    %v1293 = vtanh.pop %v1292
    %1295 = vrot.lane.b32.xlu0 %v1293, 64
    %v1296 = vpop.permute.xlu0 %1295
    %v1298 = vmul.f32 %v1280, %v1296
    %1300 = vrot.lane.b32.xlu0 %v1261, 32
    %v1301 = vpop.permute.xlu0 %1300
    %vm1303 = vcmask 257024
    %1304 = vst.msk [vmem:[#allocation2] sm:$0xf] %vm1303, %v1301
    %1306 = vrot.lane.b32.xlu0 %v1255, 96
    %v1307 = vpop.permute.xlu0 %1306
    %1309 = vst.msk [vmem:[#allocation3] sm:$0xf] %vm1303, %v1307
    %1311 = vrot.lane.b32.xlu0 %v1298, 32
    %v1312 = vpop.permute.xlu0 %1311
    %1314 = vst.msk [vmem:[#allocation4] sm:$0xf] %vm1303, %v1312
    %1316 = vrot.lane.b32.xlu0 %v1292, 96
    %v1317 = vpop.permute.xlu0 %1316
    %1319 = vst.msk [vmem:[#allocation5] sm:$0xf] %vm1303, %v1317
    // Predicated region
    $region34: #{tpu_custom_call.1} parent=1 // pred_check
      %p1320 = pneg %p65
    $region35: #{tpu_custom_call.1} parent=1 // pred_check_branch
      %1322 = sbr.rel (%p1320) target = $region37
    $region36: #{tpu_custom_call.1} parent=1 // pred_region
      %v1323 = vsel %vm94, %v1312, 0
      %1325 = vmatpush.msra.mxu0 0.0
      %1326 = vmatpush.msra.mxu0 0.0
      %1327 = vmatpush.msra.mxu0 0.0
      %1328 = vmatpush.msra.mxu0 0.0
      %1329 = vmatpush.msra.mxu0 0.0
      %1330 = vmatpush.msra.mxu0 0.0
      %1331 = vmatpush.msra.mxu0 0.0
      %1332 = vmatpush.msra.mxu0 0.0
      %1333 = vmatpush.msra.mxu0 0.0
      %1334 = vmatpush.msra.mxu0 0.0
      %1335 = vmatpush.msra.mxu0 0.0
      %1336 = vmatpush.msra.mxu0 0.0
      %1337 = vmatpush.msra.mxu0 %v85
      %1338 = vmatpush.msra.mxu0 %v84
      %1339 = vmatpush.msra.mxu0 %v83
      %1340 = vmatpush.msra.mxu0 %v82
      %1341 = vmatmul.f32.gmra.mxu0 %v1323
      %v1342 = vpop.f32.mrf.mxu0
      %v1343 = vadd.f32 0.0, %v1342
      %1344 = vdwg.mxu0
      %v1345 = vsel %vm94, %v1301, 0
      %1347 = vmatpush.msra.mxu0 0.0
      %1348 = vmatpush.msra.mxu0 0.0
      %1349 = vmatpush.msra.mxu0 0.0
      %1350 = vmatpush.msra.mxu0 0.0
      %1351 = vmatpush.msra.mxu0 0.0
      %1352 = vmatpush.msra.mxu0 0.0
      %1353 = vmatpush.msra.mxu0 0.0
      %1354 = vmatpush.msra.mxu0 0.0
      %1355 = vmatpush.msra.mxu0 0.0
      %1356 = vmatpush.msra.mxu0 0.0
      %1357 = vmatpush.msra.mxu0 0.0
      %1358 = vmatpush.msra.mxu0 0.0
      %1359 = vmatpush.msra.mxu0 %v81
      %1360 = vmatpush.msra.mxu0 %v79
      %1361 = vmatpush.msra.mxu0 %v77
      %1362 = vmatpush.msra.mxu0 %v75
      %1363 = vmatmul.f32.gmra.mxu0 %v1345
      %v1364 = vpop.f32.mrf.mxu0
      %v1365 = vadd.f32 %v1343, %v1364
      %1366 = vdwg.mxu0
      %v1367 = vadd.f32 %v1365, %v88
      %v1368 = vxor.u32 %v1367, 2147483648
      %v1369 = vmul.f32 %v1368, 1.442695
      %v1370 = vpow.pop %v1369
      %v1371 = vadd.f32 %v1370, 1.0
      %v1372 = vrcp.pop %v1371
      %v1373 = vmul.f32 %v1371, %v1372
      %v1374 = vsub.f32 1.0, %v1373
      %v1375 = vmul.f32 %v1372, %v1374
      %v1376 = vadd.f32 %v1372, %v1375
      %vm1377 = vweird.f32 %v1371
      %vm1378 = vweird.f32 %v1372
      %vm1379 = vmor %vm1377, %vm1378
      %v1380 = vsel %vm1379, %v1372, %v1376
      %v1381 = vand.u32 2147483647, %v1371
      %vm1382 = vcmp.eq.f32.partialorder %v1381, 8.507059e+37
      %v1383 = vand.u32 %v1371, 2147483648
      %v1384 = vor.u32 1.1754944e-38, %v1383
      %v1385 = vsel %vm1382, %v1384, %v1380
      %v1386 = vmul.f32 1.0, %v1385
      %v1387 = vtanh.pop %v1367
      %v1388 = vmul.f32 %v1386, %v1292
      %1390 = vrot.lane.b32.xlu0 %v1387, 64
      %v1391 = vpop.permute.xlu0 %1390
      %v1393 = vmul.f32 %v1386, %v1391
      %1395 = vrot.lane.b32.xlu0 %v1393, 32
      %v1396 = vpop.permute.xlu0 %1395
      %v1398 = vadd.f32 %v1388, %v1396
      %v1399 = vtanh.pop %v1398
      %1401 = vrot.lane.b32.xlu0 %v1399, 64
      %v1402 = vpop.permute.xlu0 %1401
      %v1404 = vmul.f32 %v1386, %v1402
      %1406 = vrot.lane.b32.xlu0 %v1404, 32
      %v1407 = vpop.permute.xlu0 %1406
      %1409 = vst.msk [vmem:[#allocation12] sm:$0xf] %vm1303, %v1407
    $region37: #{tpu_custom_call.1} parent=1 // pred_fallthru
      _
    // Predicated region
    $region38: #{tpu_custom_call.1} parent=1 // pred_check
      _
    $region39: #{tpu_custom_call.1} parent=1 // pred_check_branch
      %1411 = sbr.rel (0) target = $region41
    $region40: #{tpu_custom_call.1} parent=1 // pred_region
      %1413 = vsyncadd [#allocation8], 0
      %s1415 = sshll.u32 [#allocation12], 4
      %s1416 = int_to_ptr.vmem [resolvable:$true] %s1415
      %s1417 = sshll.u32 %s4, 4
      %s1418 = int_to_ptr.hbm [resolvable:$true] %s1417
      %1420 = dma.vmem_to_hbm [thread:$0]  %s1416, 64, %s1418, [#allocation8]
    $region41: #{tpu_custom_call.1} parent=1 // pred_fallthru
      _
    // Predicated region
    $region42: #{tpu_custom_call.1} parent=1 // pred_check
      _
    $region43: #{tpu_custom_call.1} parent=1 // pred_check_branch
      %1422 = sbr.rel (0) target = $region45
    $region44: #{tpu_custom_call.1} parent=1 // pred_region
      %1424 = dma.done [#allocation8], 64
    $region45: #{tpu_custom_call.1} parent=1 // pred_fallthru
      _
    %1425 = vsyncpa [#allocation7], 1
    %1426 = vsyncpa [#allocation10], 1
    %1427 = vsyncpa [#allocation8], 1

</llo_original>
